<compile_context>
chip_gen: v6e
topology: v6e:2x2x1
jax: 0.10.0
libtpu: 0.0.40
codegen_flags: <defaults>
</compile_context>

<pallas_src>
import jax
import jax.numpy as jnp
from jax.experimental import pallas as pl
from jax.experimental.pallas import tpu as pltpu

_LANE = 128                      # vreg lane width
_SUBLANE = 8                     # vreg sublane count (f32)
_VMEM_TABLE_BYTES = 2 * 1024 * 1024   # small-vocab fast-path threshold


def _round_up(x, m):
    return ((x + m - 1) // m) * m


def _physical_vmem_bytes():
    try:
        info = pltpu.get_tpu_info()
        for attr in ("vmem_capacity_bytes", "vmem_size_bytes", "vmem_bytes"):
            v = getattr(info, attr, None)
            if v:
                return int(v)
    except Exception:
        pass
    return 64 * 1024 * 1024      # v7x has the smallest physical VMEM (64 MiB)


def _vmem_limit_bytes(Bp, Ep, Hp, TN, w_itemsize, table_vmem_bytes):
    """Scoped-VMEM limit derived from actual block sizes (x2 for double buffers)."""
    dbl = 2
    need = 0
    need += (Ep + Hp) * 3 * TN * w_itemsize * dbl     # w_i / w_h tiles
    need += (3 * TN + TN) * 4 * dbl                   # packed biases / b_hn tiles
    need += Bp * Hp * 4 * dbl                         # h (full, constant index)
    need += Bp * TN * 4 * dbl                         # h column tile
    need += Bp * Ep * w_itemsize * dbl                # x_out (resident dec_embed)
    need += Bp * TN * 4 * dbl                         # h_out tile
    need += table_vmem_bytes * dbl                    # VMEM-resident embed table
    need = int(need * 1.5) + 2 * 1024 * 1024          # compiler scratch headroom
    cap = int(0.8 * _physical_vmem_bytes())           # ~51 MiB v7x, ~102 MiB v5e/v6e
    return max(min(need, cap), 16 * 1024 * 1024)


def _decoder_kernel(ids_ref,        # SMEM (Bp,) int32 token ids (scalar prefetch)
                    table_ref,      # HBM(ANY) or VMEM block (Vp, Ep) embedding table
                    h_ref,          # VMEM (Bp, Hp)   f32 previous hidden state (full)
                    h_tile_ref,     # VMEM (Bp, TN)   f32 hidden columns of this tile
                    wi_ref,         # VMEM (Ep, 3TN)  input weights  [r|z|n] of tile
                    wh_ref,         # VMEM (Hp, 3TN)  hidden weights [r|z|n] of tile
                    bx_ref,         # VMEM (1, 3TN)   f32 packed biases [b_ir+b_hr | b_iz+b_hz | b_in]
                    bhn_ref,        # VMEM (1, TN)    f32 b_hn (kept separate: scaled by r)
                    x_out_ref,      # VMEM (Bp, Ep)   gathered embeddings (dec_embed)
                    h_out_ref,      # VMEM (Bp, TN)   new hidden state tile
                    sem_ref):       # single shared DMA semaphore (1,)
    Bp = x_out_ref.shape[0]
    TN = h_out_ref.shape[1]
    j = pl.program_id(0)

    # ---- Embedding gather (eval-mode dropout = identity). One (1, Ep) row copy
    # per batch element, all on a single shared DMA semaphore (equal-sized copies,
    # so N starts followed by N waits is safe). `table_ref` is either a raw HBM
    # ref (large vocab) or a resident VMEM block (small-vocab fast path: one bulk
    # BlockSpec DMA + cheap local row copies). Token ids are assumed in-range
    # (out-of-range ids hit the default DMA bounds check at runtime).
    # Ids are read before any wait (keeps SMEM sst->sld forwarding intact).
    # TODO(synk): switch the unrolled start/wait loops to pl.loop for large Bp.
    copies = [
        pltpu.make_async_copy(
            table_ref.at[pl.ds(ids_ref[b], 1)],   # (1, Ep) source row
            x_out_ref.at[pl.ds(b, 1)],            # (1, Ep) destination row
            sem_ref.at[0],
        )
        for b in range(Bp)
    ]

    # Gather only on the first hidden-column tile; x_out has a constant index_map
    # so the gathered embeddings stay resident in VMEM for the remaining tiles.
    @pl.when(j == 0)
    def _start_gather():
        for cp in copies:
            cp.start()

    # ---- h @ W_h runs on the MXU while the gather DMAs are in flight. ----
    gates_h = jnp.dot(h_ref[...].astype(wh_ref.dtype), wh_ref[...],
                      preferred_element_type=jnp.float32)          # (Bp, 3TN) f32

    @pl.when(j == 0)
    def _finish_gather():
        for cp in copies:
            cp.wait()

    # ---- x @ W_i needs the gathered embeddings; no upcast before the MXU. ----
    x = x_out_ref[...]                                              # (Bp, Ep) native dtype
    gates_x = jnp.dot(x, wi_ref[...],
                      preferred_element_type=jnp.float32) + bx_ref[...]

    # ---- GRU cell, PyTorch gate order (r, z, n); gate elementwise math in f32 ----
    r = jax.nn.sigmoid(gates_x[:, 0 * TN:1 * TN] + gates_h[:, 0 * TN:1 * TN])
    z = jax.nn.sigmoid(gates_x[:, 1 * TN:2 * TN] + gates_h[:, 1 * TN:2 * TN])
    n = jnp.tanh(gates_x[:, 2 * TN:3 * TN]
                 + r * (gates_h[:, 2 * TN:3 * TN] + bhn_ref[...]))

    h_out_ref[...] = (1.0 - z) * n + z * h_tile_ref[...]


def decoder_step_padded(ids_pad, h_pad, params, gather_mode="auto"):
    """Single GRU decode step in padded layout.

    ids_pad: (Bp,) int32 (Bp multiple of 8); h_pad: (Bp, Hp) f32.
    Returns (x_pad (Bp, Ep) in embed dtype, h_new_pad (Bp, Hp) f32).
    Keep ids / hidden state in this padded layout across decode steps to avoid
    per-step re-padding in the wrapper.
    """
    embed = params["embed"]          # (Vp, Ep)
    w_i = params["w_i"]              # (Ep, nT*3*TN)  tile-interleaved
    w_h = params["w_h"]              # (Hp, nT*3*TN)  tile-interleaved
    b_x = params["b_x"]              # (1,  nT*3*TN)  f32, tile-interleaved
    b_hn = params["b_hn"]            # (1,  Hp)       f32
    TN = params["tile_n"]
    Bp = ids_pad.shape[0]
    Ep = embed.shape[1]
    Hp = w_h.shape[0]
    nT = Hp // TN

    table_bytes = int(embed.size) * embed.dtype.itemsize
    if gather_mode == "auto":
        gather_from_hbm = table_bytes > _VMEM_TABLE_BYTES
    elif gather_mode == "hbm":
        gather_from_hbm = True
    elif gather_mode == "vmem":
        gather_from_hbm = False
    else:
        raise ValueError(f"unknown gather_mode {gather_mode!r}")

    if gather_from_hbm:
        table_spec = pl.BlockSpec(memory_space=pl.ANY)          # table stays in HBM
        table_vmem_bytes = 0
    else:
        # Small-vocab fast path: one bulk contiguous DMA into VMEM (constant index).
        table_spec = pl.BlockSpec(embed.shape, lambda j, ids: (0, 0))
        table_vmem_bytes = table_bytes

    grid_spec = pltpu.PrefetchScalarGridSpec(
        num_scalar_prefetch=1,                                   # ids -> SMEM
        grid=(nT,),
        in_specs=[
            table_spec,                                          # embedding table
            pl.BlockSpec((Bp, Hp), lambda j, ids: (0, 0)),       # h (full, for matmul)
            pl.BlockSpec((Bp, TN), lambda j, ids: (0, j)),       # h columns of tile j
            pl.BlockSpec((Ep, 3 * TN), lambda j, ids: (0, j)),   # w_i tile
            pl.BlockSpec((Hp, 3 * TN), lambda j, ids: (0, j)),   # w_h tile
            pl.BlockSpec((1, 3 * TN), lambda j, ids: (0, j)),    # packed biases tile
            pl.BlockSpec((1, TN), lambda j, ids: (0, j)),        # b_hn tile
        ],
        out_specs=(
            pl.BlockSpec((Bp, Ep), lambda j, ids: (0, 0)),       # dec_embed (resident)
            pl.BlockSpec((Bp, TN), lambda j, ids: (0, j)),       # new hidden tile
        ),
        scratch_shapes=[pltpu.SemaphoreType.DMA((1,))],
    )

    x_pad, h_new_pad = pl.pallas_call(
        _decoder_kernel,
        out_shape=(
            jax.ShapeDtypeStruct((Bp, Ep), embed.dtype),
            jax.ShapeDtypeStruct((Bp, Hp), jnp.float32),
        ),
        grid_spec=grid_spec,
        compiler_params=pltpu.CompilerParams(
            dimension_semantics=("arbitrary",),
            vmem_limit_bytes=_vmem_limit_bytes(
                Bp, Ep, Hp, TN, embed.dtype.itemsize, table_vmem_bytes),
        ),
    )(ids_pad, embed, h_pad, h_pad, w_i, w_h, b_x, b_hn)
    return x_pad, h_new_pad


def decoder_forward(dec_input, dec_hidden, params, gather_mode="auto"):
    """dec_input: (B, 1) int token ids, dec_hidden: (1, B, H) f32."""
    B = dec_input.shape[0]
    E = params["embed_size"]
    H = params["hidden_size"]
    Hp = params["b_hn"].shape[1]
    Bp = _round_up(max(B, 1), _SUBLANE)

    ids_pad = jnp.zeros((Bp,), jnp.int32).at[:B].set(dec_input[:, 0].astype(jnp.int32))
    h_pad = jnp.zeros((Bp, Hp), jnp.float32).at[:B, :H].set(
        dec_hidden[0].astype(jnp.float32))

    x_pad, h_new_pad = decoder_step_padded(ids_pad, h_pad, params, gather_mode)

    x = x_pad[:B, :E].astype(jnp.float32)         # (B, E) dec_embed (seq dim squeezed)
    h_new = h_new_pad[:B, :H]                     # (B, H)

    dec_output = h_new[:, None, :]                # (B, 1, H)
    dec_hidden_out = h_new[None, :, :]            # (1, B, H)
    dec_embed_t = x[None, :, :]                   # (1, B, E) == dec_embed.transpose(0, 1)
    return dec_output, dec_hidden_out, dec_embed_t


def init_params(key, vocab_size, embed_size, hidden_size,
                param_dtype=jnp.bfloat16, tile_n=None):
    """Builds fused, lane-padded, hidden-column-tiled kernel params.

    param_dtype=bf16 (default) halves the dominant HBM traffic (weight streaming);
    the kernel keeps matmul accumulation and all gate elementwise math in f32.
    Biases stay f32 (negligible bytes). tile_n is the hidden-column tile width
    (multiple of 128); weights are packed tile-interleaved [r|z|n] per tile so
    each grid step reads one lane-dense (Ep+Hp, 3*tile_n) weight slab.
    """
    Ep = _round_up(embed_size, _LANE)
    Hp = _round_up(hidden_size, _LANE)
    if tile_n is None:
        tile_n = 256 if (Hp % 256 == 0 and Hp > 256) else 128
    assert tile_n % _LANE == 0 and Hp % tile_n == 0
    nT = Hp // tile_n
    Vp = _round_up(vocab_size, _SUBLANE)

    ks = jax.random.split(key, 13)
    s = 1.0 / jnp.sqrt(hidden_size)
    u = lambda k, shp: jax.random.uniform(k, shp, jnp.float32, -s, s)

    embed = jax.random.normal(ks[0], (vocab_size, embed_size), jnp.float32)
    w_ir, w_iz, w_in = (u(ks[i], (embed_size, hidden_size)) for i in (1, 2, 3))
    w_hr, w_hz, w_hn = (u(ks[i], (hidden_size, hidden_size)) for i in (4, 5, 6))
    b_ir, b_iz, b_in = (u(ks[i], (1, hidden_size)) for i in (7, 8, 9))
    b_hr, b_hz, b_hn = (u(ks[i], (1, hidden_size)) for i in (10, 11, 12))

    # Pad each gate to Hp columns, then interleave by hidden-column tile so the
    # grid's per-tile slab is [r_tile | z_tile | n_tile] on lane-aligned bounds.
    def pad_cols(w, rows):
        out = jnp.zeros((rows, Hp), jnp.float32)
        return out.at[:w.shape[0], :hidden_size].set(w)

    wi_g = [pad_cols(w, Ep) for w in (w_ir, w_iz, w_in)]
    wh_g = [pad_cols(w, Hp) for w in (w_hr, w_hz, w_hn)]
    bx_g = [pad_cols(b, 1) for b in (b_ir + b_hr, b_iz + b_hz, b_in)]  # fold r/z biases

    w_i = jnp.zeros((Ep, nT * 3 * tile_n), jnp.float32)
    w_h = jnp.zeros((Hp, nT * 3 * tile_n), jnp.float32)
    b_x = jnp.zeros((1, nT * 3 * tile_n), jnp.float32)
    for t in range(nT):
        src = slice(t * tile_n, (t + 1) * tile_n)
        for g in range(3):
            dst = slice((t * 3 + g) * tile_n, (t * 3 + g + 1) * tile_n)
            w_i = w_i.at[:, dst].set(wi_g[g][:, src])
            w_h = w_h.at[:, dst].set(wh_g[g][:, src])
            b_x = b_x.at[:, dst].set(bx_g[g][:, src])
    b_hn_p = jnp.zeros((1, Hp), jnp.float32).at[:, :hidden_size].set(b_hn)

    embed_p = jnp.zeros((Vp, Ep), jnp.float32).at[:vocab_size, :embed_size].set(embed)

    return {
        "embed_size": embed_size,
        "hidden_size": hidden_size,
        "tile_n": tile_n,
        # kernel tensors
        "embed": embed_p.astype(param_dtype),
        "w_i": w_i.astype(param_dtype),
        "w_h": w_h.astype(param_dtype),
        "b_x": b_x,                       # biases kept f32 (negligible bytes)
        "b_hn": b_hn_p,
        # raw (unfused) tensors, only for the pure-JAX reference check
        "raw": {
            "embed": embed,
            "w_ir": w_ir, "w_iz": w_iz, "w_in": w_in,
            "w_hr": w_hr, "w_hz": w_hz, "w_hn": w_hn,
            "b_ir": b_ir, "b_iz": b_iz, "b_in": b_in,
            "b_hr": b_hr, "b_hz": b_hz, "b_hn": b_hn,
        },
    }


def decoder_reference(dec_input, dec_hidden, params):
    """Pure-JAX reference mirroring PyTorch nn.Embedding + nn.GRU (eval dropout)."""
    p = params["raw"]
    x = p["embed"][dec_input[:, 0]]                               # (B, E)
    h = dec_hidden[0]                                             # (B, H)
    r = jax.nn.sigmoid(x @ p["w_ir"] + p["b_ir"] + h @ p["w_hr"] + p["b_hr"])
    z = jax.nn.sigmoid(x @ p["w_iz"] + p["b_iz"] + h @ p["w_hz"] + p["b_hz"])
    n = jnp.tanh(x @ p["w_in"] + p["b_in"] + r * (h @ p["w_hn"] + p["b_hn"]))
    h_new = (1.0 - z) * n + z * h
    return h_new[:, None, :], h_new[None], x[None]


if __name__ == "__main__":
    key = jax.random.PRNGKey(0)
    k_param, k_ids, k_h = jax.random.split(key, 3)

    B, V, E, H = 2, 50, 32, 32
    dec_input = jax.random.randint(k_ids, (B, 1), 0, V, dtype=jnp.int32)
    dec_hidden = jax.random.normal(k_h, (1, B, H), jnp.float32)

    # --- Config 1: f32 params, both gather paths, exact check. ---
    params_f32 = init_params(k_param, V, E, H, param_dtype=jnp.float32)
    ref = decoder_reference(dec_input, dec_hidden, params_f32)
    for mode in ("vmem", "hbm"):
        out, hid, emb_t = decoder_forward(dec_input, dec_hidden, params_f32,
                                          gather_mode=mode)
        jax.block_until_ready((out, hid, emb_t))
        assert out.shape == (B, 1, H) and hid.shape == (1, B, H) and emb_t.shape == (1, B, E)
        assert jnp.allclose(out, ref[0], atol=1e-5), mode
        assert jnp.allclose(hid, ref[1], atol=1e-5), mode
        assert jnp.allclose(emb_t, ref[2], atol=1e-5), mode

    # --- Config 2: multi-tile hidden grid (Hp=256, tile_n=128 -> 2 grid steps). ---
    H2 = 160
    params_g = init_params(k_param, V, E, H2, param_dtype=jnp.float32, tile_n=128)
    dec_hidden2 = jax.random.normal(k_h, (1, B, H2), jnp.float32)
    ref2 = decoder_reference(dec_input, dec_hidden2, params_g)
    for mode in ("vmem", "hbm"):
        out2, hid2, emb2 = decoder_forward(dec_input, dec_hidden2, params_g,
                                           gather_mode=mode)
        jax.block_until_ready((out2, hid2, emb2))
        assert out2.shape == (B, 1, H2) and hid2.shape == (1, B, H2)
        assert jnp.allclose(out2, ref2[0], atol=1e-5), mode
        assert jnp.allclose(hid2, ref2[1], atol=1e-5), mode
        assert jnp.allclose(emb2, ref2[2], atol=1e-5), mode

    # --- Config 3: default bf16 params (halved weight HBM traffic), loose check. ---
    params_bf16 = init_params(k_param, V, E, H)       # param_dtype defaults to bf16
    out3, hid3, emb3 = decoder_forward(dec_input, dec_hidden, params_bf16)
    jax.block_until_ready((out3, hid3, emb3))
    assert jnp.allclose(out3, ref[0], atol=5e-2)
    assert jnp.allclose(hid3, ref[1], atol=5e-2)
    assert jnp.allclose(emb3, ref[2], atol=5e-2)

    print("KERNEL_OK")
</pallas_src>

<mosaic_0001>
module attributes {stable_mosaic.version = 11 : i64} {
  func.func @_decoder_kernel(%arg0: i32, %arg1: memref<8xi32, #tpu.memory_space<smem>>, %arg2: memref<56x128xf32, #tpu.memory_space<vmem>>, %arg3: memref<8x128xf32, #tpu.memory_space<vmem>>, %arg4: memref<8x128xf32, #tpu.memory_space<vmem>>, %arg5: memref<128x384xf32, #tpu.memory_space<vmem>>, %arg6: memref<128x384xf32, #tpu.memory_space<vmem>>, %arg7: memref<1x384xf32, #tpu.memory_space<vmem>>, %arg8: memref<1x128xf32, #tpu.memory_space<vmem>>, %arg9: memref<8x128xf32, #tpu.memory_space<vmem>>, %arg10: memref<8x128xf32, #tpu.memory_space<vmem>>, %arg11: memref<1x!tpu.dma_semaphore, #tpu.memory_space<semaphore_mem>>) attributes {dimension_semantics = [#tpu.dimension_semantics<arbitrary>], iteration_bounds = array<i64: 1>, scalar_prefetch = 1 : i64, scratch_operands = 1 : i64, tpu.core_type = #tpu.core_type<tc>, window_params = [{pipeline_mode = #tpu.pipeline_mode<synchronous>, transform_indices = @transform_0, window_bounds = array<i64: 56, 128>}, {pipeline_mode = #tpu.pipeline_mode<synchronous>, transform_indices = @transform_1, window_bounds = array<i64: 8, 128>}, {transform_indices = @transform_2, window_bounds = array<i64: 8, 128>}, {transform_indices = @transform_3, window_bounds = array<i64: 128, 384>}, {transform_indices = @transform_4, window_bounds = array<i64: 128, 384>}, {transform_indices = @transform_5, window_bounds = array<i64: 1, 384>}, {transform_indices = @transform_6, window_bounds = array<i64: 1, 128>}, {pipeline_mode = #tpu.pipeline_mode<synchronous>, transform_indices = @transform_7, window_bounds = array<i64: 8, 128>}, {transform_indices = @transform_8, window_bounds = array<i64: 8, 128>}]} {
    %c0 = arith.constant 0 : index
    %0 = memref.load %arg1[%c0] : memref<8xi32, #tpu.memory_space<smem>>
    %c1 = arith.constant 1 : index
    %1 = memref.load %arg1[%c1] : memref<8xi32, #tpu.memory_space<smem>>
    %c2 = arith.constant 2 : index
    %2 = memref.load %arg1[%c2] : memref<8xi32, #tpu.memory_space<smem>>
    %c3 = arith.constant 3 : index
    %3 = memref.load %arg1[%c3] : memref<8xi32, #tpu.memory_space<smem>>
    %c4 = arith.constant 4 : index
    %4 = memref.load %arg1[%c4] : memref<8xi32, #tpu.memory_space<smem>>
    %c5 = arith.constant 5 : index
    %5 = memref.load %arg1[%c5] : memref<8xi32, #tpu.memory_space<smem>>
    %c6 = arith.constant 6 : index
    %6 = memref.load %arg1[%c6] : memref<8xi32, #tpu.memory_space<smem>>
    %c7 = arith.constant 7 : index
    %7 = memref.load %arg1[%c7] : memref<8xi32, #tpu.memory_space<smem>>
    %c0_i32 = arith.constant 0 : i32
    %8 = arith.cmpi eq, %arg0, %c0_i32 : i32
    %9 = arith.extui %8 : i1 to i32
    %c0_i32_0 = arith.constant 0 : i32
    %c0_i32_1 = arith.constant 0 : i32
    %c0_i32_2 = arith.constant 0 : i32
    %c0_i32_3 = arith.constant 0 : i32
    %c0_i32_4 = arith.constant 0 : i32
    %c0_i32_5 = arith.constant 0 : i32
    %c0_i32_6 = arith.constant 0 : i32
    %c0_i32_7 = arith.constant 0 : i32
    %c0_i32_8 = arith.constant 0 : i32
    %10 = arith.cmpi ne, %9, %c0_i32_8 : i32
    scf.if %10 {
      %c0_i32_39 = arith.constant 0 : i32
      %54 = tpu.memref_slice %arg2[%0, %c0_i32_39] : memref<56x128xf32, #tpu.memory_space<vmem>> -> memref<1x128xf32, #tpu.memory_space<vmem>>
      %c0_i32_40 = arith.constant 0 : i32
      %c0_i32_41 = arith.constant 0 : i32
      %55 = tpu.memref_slice %arg9[%c0_i32_40, %c0_i32_41] : memref<8x128xf32, #tpu.memory_space<vmem>> -> memref<1x128xf32, #tpu.memory_space<vmem>>
      %56 = tpu.memref_slice %arg11[%c0_i32_0] : memref<1x!tpu.dma_semaphore, #tpu.memory_space<semaphore_mem>> -> memref<1x!tpu.dma_semaphore, #tpu.memory_space<semaphore_mem>>
      %57 = tpu.memref_squeeze %56 : memref<1x!tpu.dma_semaphore, #tpu.memory_space<semaphore_mem>> -> memref<!tpu.dma_semaphore, #tpu.memory_space<semaphore_mem>>
      tpu.enqueue_dma source(%54 : memref<1x128xf32, #tpu.memory_space<vmem>>) target(%55 : memref<1x128xf32, #tpu.memory_space<vmem>>) target_semaphore(%57 : memref<!tpu.dma_semaphore, #tpu.memory_space<semaphore_mem>>)
      %c0_i32_42 = arith.constant 0 : i32
      %58 = tpu.memref_slice %arg2[%1, %c0_i32_42] : memref<56x128xf32, #tpu.memory_space<vmem>> -> memref<1x128xf32, #tpu.memory_space<vmem>>
      %c1_i32 = arith.constant 1 : i32
      %c0_i32_43 = arith.constant 0 : i32
      %59 = tpu.memref_slice %arg9[%c1_i32, %c0_i32_43] : memref<8x128xf32, #tpu.memory_space<vmem>> -> memref<1x128xf32, #tpu.memory_space<vmem>>
      %60 = tpu.memref_slice %arg11[%c0_i32_1] : memref<1x!tpu.dma_semaphore, #tpu.memory_space<semaphore_mem>> -> memref<1x!tpu.dma_semaphore, #tpu.memory_space<semaphore_mem>>
      %61 = tpu.memref_squeeze %60 : memref<1x!tpu.dma_semaphore, #tpu.memory_space<semaphore_mem>> -> memref<!tpu.dma_semaphore, #tpu.memory_space<semaphore_mem>>
      tpu.enqueue_dma source(%58 : memref<1x128xf32, #tpu.memory_space<vmem>>) target(%59 : memref<1x128xf32, #tpu.memory_space<vmem>>) target_semaphore(%61 : memref<!tpu.dma_semaphore, #tpu.memory_space<semaphore_mem>>)
      %c0_i32_44 = arith.constant 0 : i32
      %62 = tpu.memref_slice %arg2[%2, %c0_i32_44] : memref<56x128xf32, #tpu.memory_space<vmem>> -> memref<1x128xf32, #tpu.memory_space<vmem>>
      %c2_i32 = arith.constant 2 : i32
      %c0_i32_45 = arith.constant 0 : i32
      %63 = tpu.memref_slice %arg9[%c2_i32, %c0_i32_45] : memref<8x128xf32, #tpu.memory_space<vmem>> -> memref<1x128xf32, #tpu.memory_space<vmem>>
      %64 = tpu.memref_slice %arg11[%c0_i32_2] : memref<1x!tpu.dma_semaphore, #tpu.memory_space<semaphore_mem>> -> memref<1x!tpu.dma_semaphore, #tpu.memory_space<semaphore_mem>>
      %65 = tpu.memref_squeeze %64 : memref<1x!tpu.dma_semaphore, #tpu.memory_space<semaphore_mem>> -> memref<!tpu.dma_semaphore, #tpu.memory_space<semaphore_mem>>
      tpu.enqueue_dma source(%62 : memref<1x128xf32, #tpu.memory_space<vmem>>) target(%63 : memref<1x128xf32, #tpu.memory_space<vmem>>) target_semaphore(%65 : memref<!tpu.dma_semaphore, #tpu.memory_space<semaphore_mem>>)
      %c0_i32_46 = arith.constant 0 : i32
      %66 = tpu.memref_slice %arg2[%3, %c0_i32_46] : memref<56x128xf32, #tpu.memory_space<vmem>> -> memref<1x128xf32, #tpu.memory_space<vmem>>
      %c3_i32 = arith.constant 3 : i32
      %c0_i32_47 = arith.constant 0 : i32
      %67 = tpu.memref_slice %arg9[%c3_i32, %c0_i32_47] : memref<8x128xf32, #tpu.memory_space<vmem>> -> memref<1x128xf32, #tpu.memory_space<vmem>>
      %68 = tpu.memref_slice %arg11[%c0_i32_3] : memref<1x!tpu.dma_semaphore, #tpu.memory_space<semaphore_mem>> -> memref<1x!tpu.dma_semaphore, #tpu.memory_space<semaphore_mem>>
      %69 = tpu.memref_squeeze %68 : memref<1x!tpu.dma_semaphore, #tpu.memory_space<semaphore_mem>> -> memref<!tpu.dma_semaphore, #tpu.memory_space<semaphore_mem>>
      tpu.enqueue_dma source(%66 : memref<1x128xf32, #tpu.memory_space<vmem>>) target(%67 : memref<1x128xf32, #tpu.memory_space<vmem>>) target_semaphore(%69 : memref<!tpu.dma_semaphore, #tpu.memory_space<semaphore_mem>>)
      %c0_i32_48 = arith.constant 0 : i32
      %70 = tpu.memref_slice %arg2[%4, %c0_i32_48] : memref<56x128xf32, #tpu.memory_space<vmem>> -> memref<1x128xf32, #tpu.memory_space<vmem>>
      %c4_i32 = arith.constant 4 : i32
      %c0_i32_49 = arith.constant 0 : i32
      %71 = tpu.memref_slice %arg9[%c4_i32, %c0_i32_49] : memref<8x128xf32, #tpu.memory_space<vmem>> -> memref<1x128xf32, #tpu.memory_space<vmem>>
      %72 = tpu.memref_slice %arg11[%c0_i32_4] : memref<1x!tpu.dma_semaphore, #tpu.memory_space<semaphore_mem>> -> memref<1x!tpu.dma_semaphore, #tpu.memory_space<semaphore_mem>>
      %73 = tpu.memref_squeeze %72 : memref<1x!tpu.dma_semaphore, #tpu.memory_space<semaphore_mem>> -> memref<!tpu.dma_semaphore, #tpu.memory_space<semaphore_mem>>
      tpu.enqueue_dma source(%70 : memref<1x128xf32, #tpu.memory_space<vmem>>) target(%71 : memref<1x128xf32, #tpu.memory_space<vmem>>) target_semaphore(%73 : memref<!tpu.dma_semaphore, #tpu.memory_space<semaphore_mem>>)
      %c0_i32_50 = arith.constant 0 : i32
      %74 = tpu.memref_slice %arg2[%5, %c0_i32_50] : memref<56x128xf32, #tpu.memory_space<vmem>> -> memref<1x128xf32, #tpu.memory_space<vmem>>
      %c5_i32 = arith.constant 5 : i32
      %c0_i32_51 = arith.constant 0 : i32
      %75 = tpu.memref_slice %arg9[%c5_i32, %c0_i32_51] : memref<8x128xf32, #tpu.memory_space<vmem>> -> memref<1x128xf32, #tpu.memory_space<vmem>>
      %76 = tpu.memref_slice %arg11[%c0_i32_5] : memref<1x!tpu.dma_semaphore, #tpu.memory_space<semaphore_mem>> -> memref<1x!tpu.dma_semaphore, #tpu.memory_space<semaphore_mem>>
      %77 = tpu.memref_squeeze %76 : memref<1x!tpu.dma_semaphore, #tpu.memory_space<semaphore_mem>> -> memref<!tpu.dma_semaphore, #tpu.memory_space<semaphore_mem>>
      tpu.enqueue_dma source(%74 : memref<1x128xf32, #tpu.memory_space<vmem>>) target(%75 : memref<1x128xf32, #tpu.memory_space<vmem>>) target_semaphore(%77 : memref<!tpu.dma_semaphore, #tpu.memory_space<semaphore_mem>>)
      %c0_i32_52 = arith.constant 0 : i32
      %78 = tpu.memref_slice %arg2[%6, %c0_i32_52] : memref<56x128xf32, #tpu.memory_space<vmem>> -> memref<1x128xf32, #tpu.memory_space<vmem>>
      %c6_i32 = arith.constant 6 : i32
      %c0_i32_53 = arith.constant 0 : i32
      %79 = tpu.memref_slice %arg9[%c6_i32, %c0_i32_53] : memref<8x128xf32, #tpu.memory_space<vmem>> -> memref<1x128xf32, #tpu.memory_space<vmem>>
      %80 = tpu.memref_slice %arg11[%c0_i32_6] : memref<1x!tpu.dma_semaphore, #tpu.memory_space<semaphore_mem>> -> memref<1x!tpu.dma_semaphore, #tpu.memory_space<semaphore_mem>>
      %81 = tpu.memref_squeeze %80 : memref<1x!tpu.dma_semaphore, #tpu.memory_space<semaphore_mem>> -> memref<!tpu.dma_semaphore, #tpu.memory_space<semaphore_mem>>
      tpu.enqueue_dma source(%78 : memref<1x128xf32, #tpu.memory_space<vmem>>) target(%79 : memref<1x128xf32, #tpu.memory_space<vmem>>) target_semaphore(%81 : memref<!tpu.dma_semaphore, #tpu.memory_space<semaphore_mem>>)
      %c0_i32_54 = arith.constant 0 : i32
      %82 = tpu.memref_slice %arg2[%7, %c0_i32_54] : memref<56x128xf32, #tpu.memory_space<vmem>> -> memref<1x128xf32, #tpu.memory_space<vmem>>
      %c7_i32 = arith.constant 7 : i32
      %c0_i32_55 = arith.constant 0 : i32
      %83 = tpu.memref_slice %arg9[%c7_i32, %c0_i32_55] : memref<8x128xf32, #tpu.memory_space<vmem>> -> memref<1x128xf32, #tpu.memory_space<vmem>>
      %84 = tpu.memref_slice %arg11[%c0_i32_7] : memref<1x!tpu.dma_semaphore, #tpu.memory_space<semaphore_mem>> -> memref<1x!tpu.dma_semaphore, #tpu.memory_space<semaphore_mem>>
      %85 = tpu.memref_squeeze %84 : memref<1x!tpu.dma_semaphore, #tpu.memory_space<semaphore_mem>> -> memref<!tpu.dma_semaphore, #tpu.memory_space<semaphore_mem>>
      tpu.enqueue_dma source(%82 : memref<1x128xf32, #tpu.memory_space<vmem>>) target(%83 : memref<1x128xf32, #tpu.memory_space<vmem>>) target_semaphore(%85 : memref<!tpu.dma_semaphore, #tpu.memory_space<semaphore_mem>>)
    } else {
    }
    %c0_9 = arith.constant 0 : index
    %c0_10 = arith.constant 0 : index
    %11 = vector.load %arg3[%c0_9, %c0_10] : memref<8x128xf32, #tpu.memory_space<vmem>>, vector<8x128xf32>
    %c0_11 = arith.constant 0 : index
    %c0_12 = arith.constant 0 : index
    %12 = vector.load %arg6[%c0_11, %c0_12] : memref<128x384xf32, #tpu.memory_space<vmem>>, vector<128x384xf32>
    %cst = arith.constant dense<0.000000e+00> : vector<8x384xf32>
    %13 = tpu.matmul %11, %12, %cst {dimension_numbers = #tpu.dot_dimension_numbers<[1], [0], [0], [1], [0, 0, 1, 1], [], []>} : vector<8x128xf32>, vector<128x384xf32>, vector<8x384xf32> -> vector<8x384xf32>
    %c0_i32_13 = arith.constant 0 : i32
    %14 = arith.cmpi eq, %arg0, %c0_i32_13 : i32
    %15 = arith.extui %14 : i1 to i32
    %c0_i32_14 = arith.constant 0 : i32
    %c0_i32_15 = arith.constant 0 : i32
    %c0_i32_16 = arith.constant 0 : i32
    %c0_i32_17 = arith.constant 0 : i32
    %c0_i32_18 = arith.constant 0 : i32
    %c0_i32_19 = arith.constant 0 : i32
    %c0_i32_20 = arith.constant 0 : i32
    %c0_i32_21 = arith.constant 0 : i32
    %c0_i32_22 = arith.constant 0 : i32
    %16 = arith.cmpi ne, %15, %c0_i32_22 : i32
    scf.if %16 {
      %c0_i32_39 = arith.constant 0 : i32
      %54 = tpu.memref_slice %arg2[%0, %c0_i32_39] : memref<56x128xf32, #tpu.memory_space<vmem>> -> memref<1x128xf32, #tpu.memory_space<vmem>>
      %c0_i32_40 = arith.constant 0 : i32
      %c0_i32_41 = arith.constant 0 : i32
      %55 = tpu.memref_slice %arg9[%c0_i32_40, %c0_i32_41] : memref<8x128xf32, #tpu.memory_space<vmem>> -> memref<1x128xf32, #tpu.memory_space<vmem>>
      %56 = tpu.memref_slice %arg11[%c0_i32_14] : memref<1x!tpu.dma_semaphore, #tpu.memory_space<semaphore_mem>> -> memref<1x!tpu.dma_semaphore, #tpu.memory_space<semaphore_mem>>
      %57 = tpu.memref_squeeze %56 : memref<1x!tpu.dma_semaphore, #tpu.memory_space<semaphore_mem>> -> memref<!tpu.dma_semaphore, #tpu.memory_space<semaphore_mem>>
      tpu.wait_dma2 semaphore(%57 : memref<!tpu.dma_semaphore, #tpu.memory_space<semaphore_mem>>) src(%54 : memref<1x128xf32, #tpu.memory_space<vmem>>) dst(%55 : memref<1x128xf32, #tpu.memory_space<vmem>>)
      %c0_i32_42 = arith.constant 0 : i32
      %58 = tpu.memref_slice %arg2[%1, %c0_i32_42] : memref<56x128xf32, #tpu.memory_space<vmem>> -> memref<1x128xf32, #tpu.memory_space<vmem>>
      %c1_i32 = arith.constant 1 : i32
      %c0_i32_43 = arith.constant 0 : i32
      %59 = tpu.memref_slice %arg9[%c1_i32, %c0_i32_43] : memref<8x128xf32, #tpu.memory_space<vmem>> -> memref<1x128xf32, #tpu.memory_space<vmem>>
      %60 = tpu.memref_slice %arg11[%c0_i32_15] : memref<1x!tpu.dma_semaphore, #tpu.memory_space<semaphore_mem>> -> memref<1x!tpu.dma_semaphore, #tpu.memory_space<semaphore_mem>>
      %61 = tpu.memref_squeeze %60 : memref<1x!tpu.dma_semaphore, #tpu.memory_space<semaphore_mem>> -> memref<!tpu.dma_semaphore, #tpu.memory_space<semaphore_mem>>
      tpu.wait_dma2 semaphore(%61 : memref<!tpu.dma_semaphore, #tpu.memory_space<semaphore_mem>>) src(%58 : memref<1x128xf32, #tpu.memory_space<vmem>>) dst(%59 : memref<1x128xf32, #tpu.memory_space<vmem>>)
      %c0_i32_44 = arith.constant 0 : i32
      %62 = tpu.memref_slice %arg2[%2, %c0_i32_44] : memref<56x128xf32, #tpu.memory_space<vmem>> -> memref<1x128xf32, #tpu.memory_space<vmem>>
      %c2_i32 = arith.constant 2 : i32
      %c0_i32_45 = arith.constant 0 : i32
      %63 = tpu.memref_slice %arg9[%c2_i32, %c0_i32_45] : memref<8x128xf32, #tpu.memory_space<vmem>> -> memref<1x128xf32, #tpu.memory_space<vmem>>
      %64 = tpu.memref_slice %arg11[%c0_i32_16] : memref<1x!tpu.dma_semaphore, #tpu.memory_space<semaphore_mem>> -> memref<1x!tpu.dma_semaphore, #tpu.memory_space<semaphore_mem>>
      %65 = tpu.memref_squeeze %64 : memref<1x!tpu.dma_semaphore, #tpu.memory_space<semaphore_mem>> -> memref<!tpu.dma_semaphore, #tpu.memory_space<semaphore_mem>>
      tpu.wait_dma2 semaphore(%65 : memref<!tpu.dma_semaphore, #tpu.memory_space<semaphore_mem>>) src(%62 : memref<1x128xf32, #tpu.memory_space<vmem>>) dst(%63 : memref<1x128xf32, #tpu.memory_space<vmem>>)
      %c0_i32_46 = arith.constant 0 : i32
      %66 = tpu.memref_slice %arg2[%3, %c0_i32_46] : memref<56x128xf32, #tpu.memory_space<vmem>> -> memref<1x128xf32, #tpu.memory_space<vmem>>
      %c3_i32 = arith.constant 3 : i32
      %c0_i32_47 = arith.constant 0 : i32
      %67 = tpu.memref_slice %arg9[%c3_i32, %c0_i32_47] : memref<8x128xf32, #tpu.memory_space<vmem>> -> memref<1x128xf32, #tpu.memory_space<vmem>>
      %68 = tpu.memref_slice %arg11[%c0_i32_17] : memref<1x!tpu.dma_semaphore, #tpu.memory_space<semaphore_mem>> -> memref<1x!tpu.dma_semaphore, #tpu.memory_space<semaphore_mem>>
      %69 = tpu.memref_squeeze %68 : memref<1x!tpu.dma_semaphore, #tpu.memory_space<semaphore_mem>> -> memref<!tpu.dma_semaphore, #tpu.memory_space<semaphore_mem>>
      tpu.wait_dma2 semaphore(%69 : memref<!tpu.dma_semaphore, #tpu.memory_space<semaphore_mem>>) src(%66 : memref<1x128xf32, #tpu.memory_space<vmem>>) dst(%67 : memref<1x128xf32, #tpu.memory_space<vmem>>)
      %c0_i32_48 = arith.constant 0 : i32
      %70 = tpu.memref_slice %arg2[%4, %c0_i32_48] : memref<56x128xf32, #tpu.memory_space<vmem>> -> memref<1x128xf32, #tpu.memory_space<vmem>>
      %c4_i32 = arith.constant 4 : i32
      %c0_i32_49 = arith.constant 0 : i32
      %71 = tpu.memref_slice %arg9[%c4_i32, %c0_i32_49] : memref<8x128xf32, #tpu.memory_space<vmem>> -> memref<1x128xf32, #tpu.memory_space<vmem>>
      %72 = tpu.memref_slice %arg11[%c0_i32_18] : memref<1x!tpu.dma_semaphore, #tpu.memory_space<semaphore_mem>> -> memref<1x!tpu.dma_semaphore, #tpu.memory_space<semaphore_mem>>
      %73 = tpu.memref_squeeze %72 : memref<1x!tpu.dma_semaphore, #tpu.memory_space<semaphore_mem>> -> memref<!tpu.dma_semaphore, #tpu.memory_space<semaphore_mem>>
      tpu.wait_dma2 semaphore(%73 : memref<!tpu.dma_semaphore, #tpu.memory_space<semaphore_mem>>) src(%70 : memref<1x128xf32, #tpu.memory_space<vmem>>) dst(%71 : memref<1x128xf32, #tpu.memory_space<vmem>>)
      %c0_i32_50 = arith.constant 0 : i32
      %74 = tpu.memref_slice %arg2[%5, %c0_i32_50] : memref<56x128xf32, #tpu.memory_space<vmem>> -> memref<1x128xf32, #tpu.memory_space<vmem>>
      %c5_i32 = arith.constant 5 : i32
      %c0_i32_51 = arith.constant 0 : i32
      %75 = tpu.memref_slice %arg9[%c5_i32, %c0_i32_51] : memref<8x128xf32, #tpu.memory_space<vmem>> -> memref<1x128xf32, #tpu.memory_space<vmem>>
      %76 = tpu.memref_slice %arg11[%c0_i32_19] : memref<1x!tpu.dma_semaphore, #tpu.memory_space<semaphore_mem>> -> memref<1x!tpu.dma_semaphore, #tpu.memory_space<semaphore_mem>>
      %77 = tpu.memref_squeeze %76 : memref<1x!tpu.dma_semaphore, #tpu.memory_space<semaphore_mem>> -> memref<!tpu.dma_semaphore, #tpu.memory_space<semaphore_mem>>
      tpu.wait_dma2 semaphore(%77 : memref<!tpu.dma_semaphore, #tpu.memory_space<semaphore_mem>>) src(%74 : memref<1x128xf32, #tpu.memory_space<vmem>>) dst(%75 : memref<1x128xf32, #tpu.memory_space<vmem>>)
      %c0_i32_52 = arith.constant 0 : i32
      %78 = tpu.memref_slice %arg2[%6, %c0_i32_52] : memref<56x128xf32, #tpu.memory_space<vmem>> -> memref<1x128xf32, #tpu.memory_space<vmem>>
      %c6_i32 = arith.constant 6 : i32
      %c0_i32_53 = arith.constant 0 : i32
      %79 = tpu.memref_slice %arg9[%c6_i32, %c0_i32_53] : memref<8x128xf32, #tpu.memory_space<vmem>> -> memref<1x128xf32, #tpu.memory_space<vmem>>
      %80 = tpu.memref_slice %arg11[%c0_i32_20] : memref<1x!tpu.dma_semaphore, #tpu.memory_space<semaphore_mem>> -> memref<1x!tpu.dma_semaphore, #tpu.memory_space<semaphore_mem>>
      %81 = tpu.memref_squeeze %80 : memref<1x!tpu.dma_semaphore, #tpu.memory_space<semaphore_mem>> -> memref<!tpu.dma_semaphore, #tpu.memory_space<semaphore_mem>>
      tpu.wait_dma2 semaphore(%81 : memref<!tpu.dma_semaphore, #tpu.memory_space<semaphore_mem>>) src(%78 : memref<1x128xf32, #tpu.memory_space<vmem>>) dst(%79 : memref<1x128xf32, #tpu.memory_space<vmem>>)
      %c0_i32_54 = arith.constant 0 : i32
      %82 = tpu.memref_slice %arg2[%7, %c0_i32_54] : memref<56x128xf32, #tpu.memory_space<vmem>> -> memref<1x128xf32, #tpu.memory_space<vmem>>
      %c7_i32 = arith.constant 7 : i32
      %c0_i32_55 = arith.constant 0 : i32
      %83 = tpu.memref_slice %arg9[%c7_i32, %c0_i32_55] : memref<8x128xf32, #tpu.memory_space<vmem>> -> memref<1x128xf32, #tpu.memory_space<vmem>>
      %84 = tpu.memref_slice %arg11[%c0_i32_21] : memref<1x!tpu.dma_semaphore, #tpu.memory_space<semaphore_mem>> -> memref<1x!tpu.dma_semaphore, #tpu.memory_space<semaphore_mem>>
      %85 = tpu.memref_squeeze %84 : memref<1x!tpu.dma_semaphore, #tpu.memory_space<semaphore_mem>> -> memref<!tpu.dma_semaphore, #tpu.memory_space<semaphore_mem>>
      tpu.wait_dma2 semaphore(%85 : memref<!tpu.dma_semaphore, #tpu.memory_space<semaphore_mem>>) src(%82 : memref<1x128xf32, #tpu.memory_space<vmem>>) dst(%83 : memref<1x128xf32, #tpu.memory_space<vmem>>)
    } else {
    }
    %c0_23 = arith.constant 0 : index
    %c0_24 = arith.constant 0 : index
    %17 = vector.load %arg9[%c0_23, %c0_24] : memref<8x128xf32, #tpu.memory_space<vmem>>, vector<8x128xf32>
    %c0_25 = arith.constant 0 : index
    %c0_26 = arith.constant 0 : index
    %18 = vector.load %arg5[%c0_25, %c0_26] : memref<128x384xf32, #tpu.memory_space<vmem>>, vector<128x384xf32>
    %cst_27 = arith.constant dense<0.000000e+00> : vector<8x384xf32>
    %19 = tpu.matmul %17, %18, %cst_27 {dimension_numbers = #tpu.dot_dimension_numbers<[1], [0], [0], [1], [0, 0, 1, 1], [], []>} : vector<8x128xf32>, vector<128x384xf32>, vector<8x384xf32> -> vector<8x384xf32>
    %c0_28 = arith.constant 0 : index
    %c0_29 = arith.constant 0 : index
    %20 = vector.load %arg7[%c0_28, %c0_29] : memref<1x384xf32, #tpu.memory_space<vmem>>, vector<1x384xf32>
    %21 = vector.broadcast %20 : vector<1x384xf32> to vector<8x384xf32>
    %22 = arith.addf %19, %21 : vector<8x384xf32>
    %23 = vector.extract_strided_slice %22 {offsets = [0, 0], sizes = [8, 128], strides = [1, 1]} : vector<8x384xf32> to vector<8x128xf32>
    %24 = vector.extract_strided_slice %13 {offsets = [0, 0], sizes = [8, 128], strides = [1, 1]} : vector<8x384xf32> to vector<8x128xf32>
    %25 = arith.addf %23, %24 : vector<8x128xf32>
    %26 = arith.negf %25 : vector<8x128xf32>
    %27 = math.exp %26 : vector<8x128xf32>
    %cst_30 = arith.constant 1.000000e+00 : f32
    %28 = vector.broadcast %cst_30 : f32 to vector<8x128xf32>
    %29 = arith.addf %28, %27 : vector<8x128xf32>
    %30 = arith.divf %28, %29 : vector<8x128xf32>
    %31 = vector.extract_strided_slice %22 {offsets = [0, 128], sizes = [8, 128], strides = [1, 1]} : vector<8x384xf32> to vector<8x128xf32>
    %32 = vector.extract_strided_slice %13 {offsets = [0, 128], sizes = [8, 128], strides = [1, 1]} : vector<8x384xf32> to vector<8x128xf32>
    %33 = arith.addf %31, %32 : vector<8x128xf32>
    %34 = arith.negf %33 : vector<8x128xf32>
    %35 = math.exp %34 : vector<8x128xf32>
    %cst_31 = arith.constant 1.000000e+00 : f32
    %36 = vector.broadcast %cst_31 : f32 to vector<8x128xf32>
    %37 = arith.addf %36, %35 : vector<8x128xf32>
    %38 = arith.divf %36, %37 : vector<8x128xf32>
    %39 = vector.extract_strided_slice %22 {offsets = [0, 256], sizes = [8, 128], strides = [1, 1]} : vector<8x384xf32> to vector<8x128xf32>
    %40 = vector.extract_strided_slice %13 {offsets = [0, 256], sizes = [8, 128], strides = [1, 1]} : vector<8x384xf32> to vector<8x128xf32>
    %c0_32 = arith.constant 0 : index
    %c0_33 = arith.constant 0 : index
    %41 = vector.load %arg8[%c0_32, %c0_33] : memref<1x128xf32, #tpu.memory_space<vmem>>, vector<1x128xf32>
    %42 = vector.broadcast %41 : vector<1x128xf32> to vector<8x128xf32>
    %43 = arith.addf %40, %42 : vector<8x128xf32>
    %44 = arith.mulf %30, %43 : vector<8x128xf32>
    %45 = arith.addf %39, %44 : vector<8x128xf32>
    %46 = math.tanh %45 : vector<8x128xf32>
    %cst_34 = arith.constant 1.000000e+00 : f32
    %47 = vector.broadcast %cst_34 : f32 to vector<8x128xf32>
    %48 = arith.subf %47, %38 : vector<8x128xf32>
    %49 = arith.mulf %48, %46 : vector<8x128xf32>
    %c0_35 = arith.constant 0 : index
    %c0_36 = arith.constant 0 : index
    %50 = vector.load %arg4[%c0_35, %c0_36] : memref<8x128xf32, #tpu.memory_space<vmem>>, vector<8x128xf32>
    %51 = arith.mulf %38, %50 : vector<8x128xf32>
    %52 = arith.addf %49, %51 : vector<8x128xf32>
    %c0_37 = arith.constant 0 : index
    %c0_38 = arith.constant 0 : index
    %53 = vector.load %arg10[%c0_37, %c0_38] : memref<8x128xf32, #tpu.memory_space<vmem>>, vector<8x128xf32>
    tpu.vector_store %arg10[%c0_37, %c0_38], %52 {strides = array<i32>} : memref<8x128xf32, #tpu.memory_space<vmem>>, vector<8x128xf32>,
    return
  }
  func.func @transform_0(%arg0: i32, %arg1: memref<8xi32, #tpu.memory_space<smem>>) -> (i32, i32) {
    %c0_i32 = arith.constant 0 : i32
    %c0_i32_0 = arith.constant 0 : i32
    %c0_i32_1 = arith.constant 0 : i32
    return %c0_i32, %c0_i32_0 : i32, i32
  }
  func.func @transform_1(%arg0: i32, %arg1: memref<8xi32, #tpu.memory_space<smem>>) -> (i32, i32) {
    %c0_i32 = arith.constant 0 : i32
    %c0_i32_0 = arith.constant 0 : i32
    %c0_i32_1 = arith.constant 0 : i32
    return %c0_i32, %c0_i32_0 : i32, i32
  }
  func.func @transform_2(%arg0: i32, %arg1: memref<8xi32, #tpu.memory_space<smem>>) -> (i32, i32) {
    %c0_i32 = arith.constant 0 : i32
    %c0_i32_0 = arith.constant 0 : i32
    return %c0_i32, %arg0 : i32, i32
  }
  func.func @transform_3(%arg0: i32, %arg1: memref<8xi32, #tpu.memory_space<smem>>) -> (i32, i32) {
    %c0_i32 = arith.constant 0 : i32
    %c0_i32_0 = arith.constant 0 : i32
    return %c0_i32, %arg0 : i32, i32
  }
  func.func @transform_4(%arg0: i32, %arg1: memref<8xi32, #tpu.memory_space<smem>>) -> (i32, i32) {
    %c0_i32 = arith.constant 0 : i32
    %c0_i32_0 = arith.constant 0 : i32
    return %c0_i32, %arg0 : i32, i32
  }
  func.func @transform_5(%arg0: i32, %arg1: memref<8xi32, #tpu.memory_space<smem>>) -> (i32, i32) {
    %c0_i32 = arith.constant 0 : i32
    %c0_i32_0 = arith.constant 0 : i32
    return %c0_i32, %arg0 : i32, i32
  }
  func.func @transform_6(%arg0: i32, %arg1: memref<8xi32, #tpu.memory_space<smem>>) -> (i32, i32) {
    %c0_i32 = arith.constant 0 : i32
    %c0_i32_0 = arith.constant 0 : i32
    return %c0_i32, %arg0 : i32, i32
  }
  func.func @transform_7(%arg0: i32, %arg1: memref<8xi32, #tpu.memory_space<smem>>) -> (i32, i32) {
    %c0_i32 = arith.constant 0 : i32
    %c0_i32_0 = arith.constant 0 : i32
    %c0_i32_1 = arith.constant 0 : i32
    return %c0_i32, %c0_i32_0 : i32, i32
  }
  func.func @transform_8(%arg0: i32, %arg1: memref<8xi32, #tpu.memory_space<smem>>) -> (i32, i32) {
    %c0_i32 = arith.constant 0 : i32
    %c0_i32_0 = arith.constant 0 : i32
    return %c0_i32, %arg0 : i32, i32
  }
}

</mosaic_0001>

<llo_original>
// kernel: tpu_custom_call.1
$region0: #{tpu_custom_call.1}
  #allocation0 [shape = 'u32[]', space=smem, size = 0x4, offset = 0x4, fixed_abs, tag = 'smem constant byte address 0x4 - core index']
  #allocation1 [shape = 'u32[144,128]{1,0:T(1,128)}', space=vmem, size = 0x12000, scoped, tag = 'internal scratch']
  #allocation2 [shape = 's32[1]{0}', space=sflag, size = 0x4, scoped, tag = 'scratch operand']
  #allocation3 [shape = 's32[1]{0}', space=sflag, size = 0x4, scoped, tag = 'scoped memory for tpu_custom_call.1']
  #allocation4 [shape = 'u8[512]{0}', space=smem, size = 0x200, scoped, tag = 'prefetched SMEM operand 0']
  #allocation17 [shape = 's32[]', space=sflag, size = 0x4, offset = 0, fixed_abs, tag = 'sflag constant byte address 0x0 - dummy sync flag']
  #allocation18 [shape = 's32[]', space=sflag, size = 0x4, offset = 0, fixed_abs, tag = 'sflag constant byte address 0x0 - dummy sync flag']
  #allocation19 [shape = 's32[]', space=sflag, size = 0x4, offset = 0, fixed_abs, tag = 'sflag constant byte address 0x0 - dummy sync flag']
  #allocation20 [shape = 's32[]', space=sflag, size = 0x4, offset = 0, fixed_abs, tag = 'sflag constant byte address 0x0 - dummy sync flag']
  #allocation21 [shape = 's32[]', space=sflag, size = 0x4, offset = 0, fixed_abs, tag = 'sflag constant byte address 0x0 - dummy sync flag']
  #allocation22 [shape = 's32[]', space=sflag, size = 0x4, offset = 0, fixed_abs, tag = 'sflag constant byte address 0x0 - dummy sync flag']
  #allocation23 [shape = 's32[]', space=sflag, size = 0x4, offset = 0, fixed_abs, tag = 'sflag constant byte address 0x0 - dummy sync flag']
  #allocation24 [shape = 's32[]', space=sflag, size = 0x4, offset = 0, fixed_abs, tag = 'sflag constant byte address 0x0 - dummy sync flag']
  %s0 = inlined_call_operand.hbm [shape: s32[8], index: 0, kind: input, shape index: {}]
  %s1 = inlined_call_operand.hbm [shape: f32[56,128], index: 1, kind: input, shape index: {}]
  %s2 = inlined_call_operand.hbm [shape: f32[8,128], index: 2, kind: input, shape index: {}]
  %s3 = inlined_call_operand.hbm [shape: f32[8,128], index: 3, kind: input, shape index: {}]
  %s4 = inlined_call_operand.hbm [shape: f32[128,384], index: 4, kind: input, shape index: {}]
  %s5 = inlined_call_operand.hbm [shape: f32[128,384], index: 5, kind: input, shape index: {}]
  %s6 = inlined_call_operand.vmem [shape: f32[1,384], index: 6, kind: input, shape index: {}]
  %s7 = inlined_call_operand.vmem [shape: f32[1,128], index: 7, kind: input, shape index: {}]
  %s8 = inlined_call_operand.hbm [shape: f32[8,128], index: 8, kind: output, shape index: {0}]
  %s9 = inlined_call_operand.hbm [shape: f32[8,128], index: 9, kind: output, shape index: {1}]
  %10 = xla_tuple %s8, %s9
  %s11 = sld [smem:[#allocation0]]
  $region314: #{tpu_custom_call.1} parent=0
    _
  %s13 = ssub.s32 1, %s11
  %s14 = scalar_select 0, %s13, %s11
  %16 = dma.hbm_to_smem %s0, 16, [#allocation4], [#allocation3]
  %17 = dma.done [#allocation3], 16
  %18 = sfence
  $region1: #{tpu_custom_call.1} parent=0
    #allocation5 [shape = 'u8[28672]{0}', space=vmem, size = 0x7000, scoped, tag = 'input window, operand 1, single buffered']
    #allocation6 [shape = 's32[1]{0}', space=sflag, size = 0x4, scoped, tag = 'scoped memory for tpu_custom_call.1']
    #allocation7 [shape = 's32[1]{0}', space=sflag, size = 0x4, scoped, tag = 'scoped memory for tpu_custom_call.1']
    #allocation8 [shape = 'u8[4096]{0}', space=vmem, size = 0x1000, scoped, tag = 'input window, operand 2, single buffered']
    #allocation9 [shape = 's32[1]{0}', space=sflag, size = 0x4, scoped, tag = 'scoped memory for tpu_custom_call.1']
    #allocation10 [shape = 'u8[4096]{0}', space=vmem, size = 0x1000, scoped, tag = 'input window, operand 3, single buffered']
    #allocation11 [shape = 'u8[196608]{0}', space=vmem, size = 0x30000, scoped, tag = 'input window, operand 4, single buffered']
    #allocation12 [shape = 's32[1]{0}', space=sflag, size = 0x4, scoped, tag = 'scoped memory for tpu_custom_call.1']
    #allocation13 [shape = 'u8[196608]{0}', space=vmem, size = 0x30000, scoped, tag = 'input window, operand 5, single buffered']
    #allocation14 [shape = 'u8[4096]{0}', space=vmem, size = 0x1000, scoped, tag = 'output window, operand 0, single buffered']
    #allocation15 [shape = 'u8[4096]{0}', space=vmem, size = 0x1000, scoped, tag = 'output window, operand 1, single buffered']
    #allocation16 [shape = 's32[1]{0}', space=sflag, size = 0x4, scoped, tag = 'scoped memory for tpu_custom_call.1']
    %19 = vsyncpa [#allocation6], 0
    %20 = vsyncpa [#allocation9], 0
    %21 = vsyncpa [#allocation12], 0
    %22 = vsyncpa [#allocation7], 0
    %23 = vsyncpa [#allocation16], 0
    // Predicated region
    $region2: #{tpu_custom_call.1} parent=1 // pred_check
      _
    $region3: #{tpu_custom_call.1} parent=1 // pred_check_branch
      %25 = sbr.rel (0) target = $region5
    $region4: #{tpu_custom_call.1} parent=1 // pred_region
      %s27 = ssub.s32 896, 896
      %28 = vsyncadd [#allocation6], %s27
      %s29 = sshll.u32 [#allocation5], 4
      %s30 = int_to_ptr.vmem [resolvable:$true] %s29
      %35 = dma.hbm_to_vmem [thread:$0]  %s1, 896, %s30, [#allocation6], 128, 128, 8
    $region5: #{tpu_custom_call.1} parent=1 // pred_fallthru
      _
    // Predicated region
    $region6: #{tpu_custom_call.1} parent=1 // pred_check
      _
    $region7: #{tpu_custom_call.1} parent=1 // pred_check_branch
      %37 = sbr.rel (0) target = $region9
    $region8: #{tpu_custom_call.1} parent=1 // pred_region
      %s39 = ssub.s32 128, 128
      %40 = vsyncadd [#allocation9], %s39
      %s42 = sshll.u32 [#allocation8], 4
      %s43 = int_to_ptr.vmem [resolvable:$true] %s42
      %45 = dma.hbm_to_vmem [thread:$0]  %s2, 128, %s43, [#allocation9]
    $region9: #{tpu_custom_call.1} parent=1 // pred_fallthru
      _
    // Predicated region
    $region10: #{tpu_custom_call.1} parent=1 // pred_check
      _
    $region11: #{tpu_custom_call.1} parent=1 // pred_check_branch
      %47 = sbr.rel (0) target = $region13
    $region12: #{tpu_custom_call.1} parent=1 // pred_region
      %s49 = ssub.s32 128, 128
      %50 = vsyncadd [#allocation9], %s49
      %s52 = sshll.u32 [#allocation10], 4
      %s53 = int_to_ptr.vmem [resolvable:$true] %s52
      %55 = dma.hbm_to_vmem [thread:$0]  %s3, 128, %s53, [#allocation9]
    $region13: #{tpu_custom_call.1} parent=1 // pred_fallthru
      _
    // Predicated region
    $region14: #{tpu_custom_call.1} parent=1 // pred_check
      _
    $region15: #{tpu_custom_call.1} parent=1 // pred_check_branch
      %57 = sbr.rel (0) target = $region17
    $region16: #{tpu_custom_call.1} parent=1 // pred_region
      %s59 = ssub.s32 6144, 6144
      %60 = vsyncadd [#allocation12], %s59
      %s61 = sshll.u32 [#allocation11], 4
      %s62 = int_to_ptr.vmem [resolvable:$true] %s61
      %67 = dma.hbm_to_vmem [thread:$0]  %s4, 6144, %s62, [#allocation12], 384, 384, 24
    $region17: #{tpu_custom_call.1} parent=1 // pred_fallthru
      _
    // Predicated region
    $region18: #{tpu_custom_call.1} parent=1 // pred_check
      _
    $region19: #{tpu_custom_call.1} parent=1 // pred_check_branch
      %69 = sbr.rel (0) target = $region21
    $region20: #{tpu_custom_call.1} parent=1 // pred_region
      %s71 = ssub.s32 6144, 6144
      %72 = vsyncadd [#allocation12], %s71
      %s73 = sshll.u32 [#allocation13], 4
      %s74 = int_to_ptr.vmem [resolvable:$true] %s73
      %79 = dma.hbm_to_vmem [thread:$0]  %s5, 6144, %s74, [#allocation12], 384, 384, 24
    $region21: #{tpu_custom_call.1} parent=1 // pred_fallthru
      _
    // Predicated region
    $region22: #{tpu_custom_call.1} parent=1 // pred_check
      _
    $region23: #{tpu_custom_call.1} parent=1 // pred_check_branch
      %81 = sbr.rel (0) target = $region25
    $region24: #{tpu_custom_call.1} parent=1 // pred_region
      _
    $region25: #{tpu_custom_call.1} parent=1 // pred_fallthru
      _
    // Predicated region
    $region26: #{tpu_custom_call.1} parent=1 // pred_check
      _
    $region27: #{tpu_custom_call.1} parent=1 // pred_check_branch
      %83 = sbr.rel (0) target = $region29
    $region28: #{tpu_custom_call.1} parent=1 // pred_region
      _
    $region29: #{tpu_custom_call.1} parent=1 // pred_fallthru
      _
    // Predicated region
    $region30: #{tpu_custom_call.1} parent=1 // pred_check
      _
    $region31: #{tpu_custom_call.1} parent=1 // pred_check_branch
      %85 = sbr.rel (0) target = $region33
    $region32: #{tpu_custom_call.1} parent=1 // pred_region
      %86 = dma.done [#allocation6], 896
    $region33: #{tpu_custom_call.1} parent=1 // pred_fallthru
      _
    // Predicated region
    $region34: #{tpu_custom_call.1} parent=1 // pred_check
      _
    $region35: #{tpu_custom_call.1} parent=1 // pred_check_branch
      %88 = sbr.rel (0) target = $region37
    $region36: #{tpu_custom_call.1} parent=1 // pred_region
      %89 = dma.done [#allocation9], 128
    $region37: #{tpu_custom_call.1} parent=1 // pred_fallthru
      _
    // Predicated region
    $region38: #{tpu_custom_call.1} parent=1 // pred_check
      _
    $region39: #{tpu_custom_call.1} parent=1 // pred_check_branch
      %91 = sbr.rel (0) target = $region41
    $region40: #{tpu_custom_call.1} parent=1 // pred_region
      %92 = dma.done [#allocation9], 128
    $region41: #{tpu_custom_call.1} parent=1 // pred_fallthru
      _
    // Predicated region
    $region42: #{tpu_custom_call.1} parent=1 // pred_check
      _
    $region43: #{tpu_custom_call.1} parent=1 // pred_check_branch
      %94 = sbr.rel (0) target = $region45
    $region44: #{tpu_custom_call.1} parent=1 // pred_region
      %95 = dma.done [#allocation12], 6144
    $region45: #{tpu_custom_call.1} parent=1 // pred_fallthru
      _
    // Predicated region
    $region46: #{tpu_custom_call.1} parent=1 // pred_check
      _
    $region47: #{tpu_custom_call.1} parent=1 // pred_check_branch
      %97 = sbr.rel (0) target = $region49
    $region48: #{tpu_custom_call.1} parent=1 // pred_region
      %98 = dma.done [#allocation12], 6144
    $region49: #{tpu_custom_call.1} parent=1 // pred_fallthru
      _
    %s99 = sld [smem:[#allocation4]]
    %s100 = sld [smem:[#allocation4 + $0x1]]
    %s101 = sld [smem:[#allocation4 + $0x2]]
    %s102 = sld [smem:[#allocation4 + $0x3]]
    %s103 = sld [smem:[#allocation4 + $0x4]]
    %s104 = sld [smem:[#allocation4 + $0x5]]
    %s105 = sld [smem:[#allocation4 + $0x6]]
    %s106 = sld [smem:[#allocation4 + $0x7]]
    %p107 = scmp.eq.s32.totalorder 0, 0
    // Predicated region
    $region50: #{tpu_custom_call.1} parent=1 // pred_check
      %p108 = pneg %p107
    $region51: #{tpu_custom_call.1} parent=1 // pred_check_branch
      %110 = sbr.rel (%p108) target = $region53
    $region52: #{tpu_custom_call.1} parent=1 // pred_region
      %s111 = scalar_lea.vmem [#allocation5], %s99
      %p113 = scmp.lt.u32.totalorder 1, 8
      %p114 = pneg %p113
      // Predicated region
      $region54: #{tpu_custom_call.1} parent=52 // pred_check
        _
      $region55: #{tpu_custom_call.1} parent=52 // pred_check_branch
        %116 = sbr.rel (%p113) target = $region57
      $region56: #{tpu_custom_call.1} parent=52 // pred_region
        %s132 = sand.u32 1, 7
        %p133 = scmp.eq.s32.totalorder %s132, 0
        %p134 = pneg %p133
        // Predicated region
        $region69: #{tpu_custom_call.1} parent=56 // pred_check
          _
        $region70: #{tpu_custom_call.1} parent=56 // pred_check_branch
          %136 = sbr.rel (%p133) target = $region72
        $region71: #{tpu_custom_call.1} parent=56 // pred_region
          %s137 = sand.u32 1, 7
          %s138 = ssub.s32 1, %s137
          %s139 = scalar_lea.vmem %s111, %s138 [#allocation5]
          %s140 = ssub.s32 1, %s137
          %s141 = scalar_lea.vmem [#allocation14], %s140
          %s142 = sshll.u32 1, %s137
          %s143 = ssub.s32 %s142, 1
          loop: start=0, step=1, limit=1
          $region73: #{tpu_custom_call.1} parent=71 // loop_pre_header
            _
          $region74: #{tpu_custom_call.1} parent=71 // loop_header
            %s145 = sphi 0, %s149
            %p146 = scmp.ge.s32.totalorder %s145, 1
            %s150 = sphi %s139, %s139
            %s151 = sphi %s141, %s141
          $region75: #{tpu_custom_call.1} parent=71 // loop_header_branch
            %148 = sbr.rel (%p146) target = $region79
          $region76: #{tpu_custom_call.1} parent=71 // loop_body
            %v152 = vld [vmem:[%s150] sm:%s143]
            %153 = vst [vmem:[%s151] sm:%s143] %v152
          $region77: #{tpu_custom_call.1} parent=71 // loop_footer
            %s149 = sadd.s32 1, %s145
          $region78: #{tpu_custom_call.1} parent=71 // loop_footer_branch
            %144 = sbr.rel target = $region74
          $region79: #{tpu_custom_call.1} parent=71 // loop_exit
            _
        $region72: #{tpu_custom_call.1} parent=56 // pred_fallthru
          _
      $region57: #{tpu_custom_call.1} parent=52 // pred_fallthru
        _
      // Predicated region
      $region58: #{tpu_custom_call.1} parent=52 // pred_check
        %p117 = pneg %p113
      $region59: #{tpu_custom_call.1} parent=52 // pred_check_branch
        %119 = sbr.rel (%p117) target = $region61
      $region60: #{tpu_custom_call.1} parent=52 // pred_region
        %s120 = sshll.u32 1, 1
        %s121 = ssub.s32 %s120, 1
        loop: start=0, step=1, limit=1
        $region62: #{tpu_custom_call.1} parent=60 // loop_pre_header
          _
        $region63: #{tpu_custom_call.1} parent=60 // loop_header
          %s123 = sphi 0, %s127
          %p124 = scmp.ge.s32.totalorder %s123, 1
          %s128 = sphi %s111, %s111
          %s129 = sphi [#allocation14], [#allocation14]
        $region64: #{tpu_custom_call.1} parent=60 // loop_header_branch
          %126 = sbr.rel (%p124) target = $region68
        $region65: #{tpu_custom_call.1} parent=60 // loop_body
          %v130 = vld [vmem:[%s128] sm:%s121]
          %131 = vst [vmem:[%s129] sm:%s121] %v130
        $region66: #{tpu_custom_call.1} parent=60 // loop_footer
          %s127 = sadd.s32 1, %s123
        $region67: #{tpu_custom_call.1} parent=60 // loop_footer_branch
          %122 = sbr.rel target = $region63
        $region68: #{tpu_custom_call.1} parent=60 // loop_exit
          _
      $region61: #{tpu_custom_call.1} parent=52 // pred_fallthru
        _
      // Predicated region
      $region80: #{tpu_custom_call.1} parent=52 // pred_check
        _
      $region81: #{tpu_custom_call.1} parent=52 // pred_check_branch
        %156 = sbr.rel (0) target = $region83
      $region82: #{tpu_custom_call.1} parent=52 // pred_region
        %157 = vsyncadd [#allocation2], 16
      $region83: #{tpu_custom_call.1} parent=52 // pred_fallthru
        _
      %s158 = scalar_lea.vmem [#allocation5], %s100
      %s159 = scalar_lea.vmem [#allocation14], 1
      %p161 = scmp.lt.u32.totalorder 1, 8
      %p162 = pneg %p161
      // Predicated region
      $region84: #{tpu_custom_call.1} parent=52 // pred_check
        _
      $region85: #{tpu_custom_call.1} parent=52 // pred_check_branch
        %164 = sbr.rel (%p161) target = $region87
      $region86: #{tpu_custom_call.1} parent=52 // pred_region
        %s180 = sand.u32 1, 7
        %p181 = scmp.eq.s32.totalorder %s180, 0
        %p182 = pneg %p181
        // Predicated region
        $region99: #{tpu_custom_call.1} parent=86 // pred_check
          _
        $region100: #{tpu_custom_call.1} parent=86 // pred_check_branch
          %184 = sbr.rel (%p181) target = $region102
        $region101: #{tpu_custom_call.1} parent=86 // pred_region
          %s185 = sand.u32 1, 7
          %s186 = ssub.s32 1, %s185
          %s187 = scalar_lea.vmem %s158, %s186 [#allocation5]
          %s188 = ssub.s32 1, %s185
          %s189 = scalar_lea.vmem %s159, %s188 [#allocation14]
          %s190 = sshll.u32 1, %s185
          %s191 = ssub.s32 %s190, 1
          loop: start=0, step=1, limit=1
          $region103: #{tpu_custom_call.1} parent=101 // loop_pre_header
            _
          $region104: #{tpu_custom_call.1} parent=101 // loop_header
            %s193 = sphi 0, %s197
            %p194 = scmp.ge.s32.totalorder %s193, 1
            %s198 = sphi %s187, %s187
            %s199 = sphi %s189, %s189
          $region105: #{tpu_custom_call.1} parent=101 // loop_header_branch
            %196 = sbr.rel (%p194) target = $region109
          $region106: #{tpu_custom_call.1} parent=101 // loop_body
            %v200 = vld [vmem:[%s198] sm:%s191]
            %201 = vst [vmem:[%s199] sm:%s191] %v200
          $region107: #{tpu_custom_call.1} parent=101 // loop_footer
            %s197 = sadd.s32 1, %s193
          $region108: #{tpu_custom_call.1} parent=101 // loop_footer_branch
            %192 = sbr.rel target = $region104
          $region109: #{tpu_custom_call.1} parent=101 // loop_exit
            _
        $region102: #{tpu_custom_call.1} parent=86 // pred_fallthru
          _
      $region87: #{tpu_custom_call.1} parent=52 // pred_fallthru
        _
      // Predicated region
      $region88: #{tpu_custom_call.1} parent=52 // pred_check
        %p165 = pneg %p161
      $region89: #{tpu_custom_call.1} parent=52 // pred_check_branch
        %167 = sbr.rel (%p165) target = $region91
      $region90: #{tpu_custom_call.1} parent=52 // pred_region
        %s168 = sshll.u32 1, 1
        %s169 = ssub.s32 %s168, 1
        loop: start=0, step=1, limit=1
        $region92: #{tpu_custom_call.1} parent=90 // loop_pre_header
          _
        $region93: #{tpu_custom_call.1} parent=90 // loop_header
          %s171 = sphi 0, %s175
          %p172 = scmp.ge.s32.totalorder %s171, 1
          %s176 = sphi %s158, %s158
          %s177 = sphi %s159, %s159
        $region94: #{tpu_custom_call.1} parent=90 // loop_header_branch
          %174 = sbr.rel (%p172) target = $region98
        $region95: #{tpu_custom_call.1} parent=90 // loop_body
          %v178 = vld [vmem:[%s176] sm:%s169]
          %179 = vst [vmem:[%s177] sm:%s169] %v178
        $region96: #{tpu_custom_call.1} parent=90 // loop_footer
          %s175 = sadd.s32 1, %s171
        $region97: #{tpu_custom_call.1} parent=90 // loop_footer_branch
          %170 = sbr.rel target = $region93
        $region98: #{tpu_custom_call.1} parent=90 // loop_exit
          _
      $region91: #{tpu_custom_call.1} parent=52 // pred_fallthru
        _
      // Predicated region
      $region110: #{tpu_custom_call.1} parent=52 // pred_check
        _
      $region111: #{tpu_custom_call.1} parent=52 // pred_check_branch
        %204 = sbr.rel (0) target = $region113
      $region112: #{tpu_custom_call.1} parent=52 // pred_region
        %205 = vsyncadd [#allocation2], 16
      $region113: #{tpu_custom_call.1} parent=52 // pred_fallthru
        _
      %s206 = scalar_lea.vmem [#allocation5], %s101
      %s207 = scalar_lea.vmem [#allocation14], 2
      %p209 = scmp.lt.u32.totalorder 1, 8
      %p210 = pneg %p209
      // Predicated region
      $region114: #{tpu_custom_call.1} parent=52 // pred_check
        _
      $region115: #{tpu_custom_call.1} parent=52 // pred_check_branch
        %212 = sbr.rel (%p209) target = $region117
      $region116: #{tpu_custom_call.1} parent=52 // pred_region
        %s228 = sand.u32 1, 7
        %p229 = scmp.eq.s32.totalorder %s228, 0
        %p230 = pneg %p229
        // Predicated region
        $region129: #{tpu_custom_call.1} parent=116 // pred_check
          _
        $region130: #{tpu_custom_call.1} parent=116 // pred_check_branch
          %232 = sbr.rel (%p229) target = $region132
        $region131: #{tpu_custom_call.1} parent=116 // pred_region
          %s233 = sand.u32 1, 7
          %s234 = ssub.s32 1, %s233
          %s235 = scalar_lea.vmem %s206, %s234 [#allocation5]
          %s236 = ssub.s32 1, %s233
          %s237 = scalar_lea.vmem %s207, %s236 [#allocation14]
          %s238 = sshll.u32 1, %s233
          %s239 = ssub.s32 %s238, 1
          loop: start=0, step=1, limit=1
          $region133: #{tpu_custom_call.1} parent=131 // loop_pre_header
            _
          $region134: #{tpu_custom_call.1} parent=131 // loop_header
            %s241 = sphi 0, %s245
            %p242 = scmp.ge.s32.totalorder %s241, 1
            %s246 = sphi %s235, %s235
            %s247 = sphi %s237, %s237
          $region135: #{tpu_custom_call.1} parent=131 // loop_header_branch
            %244 = sbr.rel (%p242) target = $region139
          $region136: #{tpu_custom_call.1} parent=131 // loop_body
            %v248 = vld [vmem:[%s246] sm:%s239]
            %249 = vst [vmem:[%s247] sm:%s239] %v248
          $region137: #{tpu_custom_call.1} parent=131 // loop_footer
            %s245 = sadd.s32 1, %s241
          $region138: #{tpu_custom_call.1} parent=131 // loop_footer_branch
            %240 = sbr.rel target = $region134
          $region139: #{tpu_custom_call.1} parent=131 // loop_exit
            _
        $region132: #{tpu_custom_call.1} parent=116 // pred_fallthru
          _
      $region117: #{tpu_custom_call.1} parent=52 // pred_fallthru
        _
      // Predicated region
      $region118: #{tpu_custom_call.1} parent=52 // pred_check
        %p213 = pneg %p209
      $region119: #{tpu_custom_call.1} parent=52 // pred_check_branch
        %215 = sbr.rel (%p213) target = $region121
      $region120: #{tpu_custom_call.1} parent=52 // pred_region
        %s216 = sshll.u32 1, 1
        %s217 = ssub.s32 %s216, 1
        loop: start=0, step=1, limit=1
        $region122: #{tpu_custom_call.1} parent=120 // loop_pre_header
          _
        $region123: #{tpu_custom_call.1} parent=120 // loop_header
          %s219 = sphi 0, %s223
          %p220 = scmp.ge.s32.totalorder %s219, 1
          %s224 = sphi %s206, %s206
          %s225 = sphi %s207, %s207
        $region124: #{tpu_custom_call.1} parent=120 // loop_header_branch
          %222 = sbr.rel (%p220) target = $region128
        $region125: #{tpu_custom_call.1} parent=120 // loop_body
          %v226 = vld [vmem:[%s224] sm:%s217]
          %227 = vst [vmem:[%s225] sm:%s217] %v226
        $region126: #{tpu_custom_call.1} parent=120 // loop_footer
          %s223 = sadd.s32 1, %s219
        $region127: #{tpu_custom_call.1} parent=120 // loop_footer_branch
          %218 = sbr.rel target = $region123
        $region128: #{tpu_custom_call.1} parent=120 // loop_exit
          _
      $region121: #{tpu_custom_call.1} parent=52 // pred_fallthru
        _
      // Predicated region
      $region140: #{tpu_custom_call.1} parent=52 // pred_check
        _
      $region141: #{tpu_custom_call.1} parent=52 // pred_check_branch
        %252 = sbr.rel (0) target = $region143
      $region142: #{tpu_custom_call.1} parent=52 // pred_region
        %253 = vsyncadd [#allocation2], 16
      $region143: #{tpu_custom_call.1} parent=52 // pred_fallthru
        _
      %s254 = scalar_lea.vmem [#allocation5], %s102
      %s255 = scalar_lea.vmem [#allocation14], 3
      %p257 = scmp.lt.u32.totalorder 1, 8
      %p258 = pneg %p257
      // Predicated region
      $region144: #{tpu_custom_call.1} parent=52 // pred_check
        _
      $region145: #{tpu_custom_call.1} parent=52 // pred_check_branch
        %260 = sbr.rel (%p257) target = $region147
      $region146: #{tpu_custom_call.1} parent=52 // pred_region
        %s276 = sand.u32 1, 7
        %p277 = scmp.eq.s32.totalorder %s276, 0
        %p278 = pneg %p277
        // Predicated region
        $region159: #{tpu_custom_call.1} parent=146 // pred_check
          _
        $region160: #{tpu_custom_call.1} parent=146 // pred_check_branch
          %280 = sbr.rel (%p277) target = $region162
        $region161: #{tpu_custom_call.1} parent=146 // pred_region
          %s281 = sand.u32 1, 7
          %s282 = ssub.s32 1, %s281
          %s283 = scalar_lea.vmem %s254, %s282 [#allocation5]
          %s284 = ssub.s32 1, %s281
          %s285 = scalar_lea.vmem %s255, %s284 [#allocation14]
          %s286 = sshll.u32 1, %s281
          %s287 = ssub.s32 %s286, 1
          loop: start=0, step=1, limit=1
          $region163: #{tpu_custom_call.1} parent=161 // loop_pre_header
            _
          $region164: #{tpu_custom_call.1} parent=161 // loop_header
            %s289 = sphi 0, %s293
            %p290 = scmp.ge.s32.totalorder %s289, 1
            %s294 = sphi %s283, %s283
            %s295 = sphi %s285, %s285
          $region165: #{tpu_custom_call.1} parent=161 // loop_header_branch
            %292 = sbr.rel (%p290) target = $region169
          $region166: #{tpu_custom_call.1} parent=161 // loop_body
            %v296 = vld [vmem:[%s294] sm:%s287]
            %297 = vst [vmem:[%s295] sm:%s287] %v296
          $region167: #{tpu_custom_call.1} parent=161 // loop_footer
            %s293 = sadd.s32 1, %s289
          $region168: #{tpu_custom_call.1} parent=161 // loop_footer_branch
            %288 = sbr.rel target = $region164
          $region169: #{tpu_custom_call.1} parent=161 // loop_exit
            _
        $region162: #{tpu_custom_call.1} parent=146 // pred_fallthru
          _
      $region147: #{tpu_custom_call.1} parent=52 // pred_fallthru
        _
      // Predicated region
      $region148: #{tpu_custom_call.1} parent=52 // pred_check
        %p261 = pneg %p257
      $region149: #{tpu_custom_call.1} parent=52 // pred_check_branch
        %263 = sbr.rel (%p261) target = $region151
      $region150: #{tpu_custom_call.1} parent=52 // pred_region
        %s264 = sshll.u32 1, 1
        %s265 = ssub.s32 %s264, 1
        loop: start=0, step=1, limit=1
        $region152: #{tpu_custom_call.1} parent=150 // loop_pre_header
          _
        $region153: #{tpu_custom_call.1} parent=150 // loop_header
          %s267 = sphi 0, %s271
          %p268 = scmp.ge.s32.totalorder %s267, 1
          %s272 = sphi %s254, %s254
          %s273 = sphi %s255, %s255
        $region154: #{tpu_custom_call.1} parent=150 // loop_header_branch
          %270 = sbr.rel (%p268) target = $region158
        $region155: #{tpu_custom_call.1} parent=150 // loop_body
          %v274 = vld [vmem:[%s272] sm:%s265]
          %275 = vst [vmem:[%s273] sm:%s265] %v274
        $region156: #{tpu_custom_call.1} parent=150 // loop_footer
          %s271 = sadd.s32 1, %s267
        $region157: #{tpu_custom_call.1} parent=150 // loop_footer_branch
          %266 = sbr.rel target = $region153
        $region158: #{tpu_custom_call.1} parent=150 // loop_exit
          _
      $region151: #{tpu_custom_call.1} parent=52 // pred_fallthru
        _
      // Predicated region
      $region170: #{tpu_custom_call.1} parent=52 // pred_check
        _
      $region171: #{tpu_custom_call.1} parent=52 // pred_check_branch
        %300 = sbr.rel (0) target = $region173
      $region172: #{tpu_custom_call.1} parent=52 // pred_region
        %301 = vsyncadd [#allocation2], 16
      $region173: #{tpu_custom_call.1} parent=52 // pred_fallthru
        _
      %s302 = scalar_lea.vmem [#allocation5], %s103
      %s303 = scalar_lea.vmem [#allocation14], 4
      %p305 = scmp.lt.u32.totalorder 1, 8
      %p306 = pneg %p305
      // Predicated region
      $region174: #{tpu_custom_call.1} parent=52 // pred_check
        _
      $region175: #{tpu_custom_call.1} parent=52 // pred_check_branch
        %308 = sbr.rel (%p305) target = $region177
      $region176: #{tpu_custom_call.1} parent=52 // pred_region
        %s324 = sand.u32 1, 7
        %p325 = scmp.eq.s32.totalorder %s324, 0
        %p326 = pneg %p325
        // Predicated region
        $region189: #{tpu_custom_call.1} parent=176 // pred_check
          _
        $region190: #{tpu_custom_call.1} parent=176 // pred_check_branch
          %328 = sbr.rel (%p325) target = $region192
        $region191: #{tpu_custom_call.1} parent=176 // pred_region
          %s329 = sand.u32 1, 7
          %s330 = ssub.s32 1, %s329
          %s331 = scalar_lea.vmem %s302, %s330 [#allocation5]
          %s332 = ssub.s32 1, %s329
          %s333 = scalar_lea.vmem %s303, %s332 [#allocation14]
          %s334 = sshll.u32 1, %s329
          %s335 = ssub.s32 %s334, 1
          loop: start=0, step=1, limit=1
          $region193: #{tpu_custom_call.1} parent=191 // loop_pre_header
            _
          $region194: #{tpu_custom_call.1} parent=191 // loop_header
            %s337 = sphi 0, %s341
            %p338 = scmp.ge.s32.totalorder %s337, 1
            %s342 = sphi %s331, %s331
            %s343 = sphi %s333, %s333
          $region195: #{tpu_custom_call.1} parent=191 // loop_header_branch
            %340 = sbr.rel (%p338) target = $region199
          $region196: #{tpu_custom_call.1} parent=191 // loop_body
            %v344 = vld [vmem:[%s342] sm:%s335]
            %345 = vst [vmem:[%s343] sm:%s335] %v344
          $region197: #{tpu_custom_call.1} parent=191 // loop_footer
            %s341 = sadd.s32 1, %s337
          $region198: #{tpu_custom_call.1} parent=191 // loop_footer_branch
            %336 = sbr.rel target = $region194
          $region199: #{tpu_custom_call.1} parent=191 // loop_exit
            _
        $region192: #{tpu_custom_call.1} parent=176 // pred_fallthru
          _
      $region177: #{tpu_custom_call.1} parent=52 // pred_fallthru
        _
      // Predicated region
      $region178: #{tpu_custom_call.1} parent=52 // pred_check
        %p309 = pneg %p305
      $region179: #{tpu_custom_call.1} parent=52 // pred_check_branch
        %311 = sbr.rel (%p309) target = $region181
      $region180: #{tpu_custom_call.1} parent=52 // pred_region
        %s312 = sshll.u32 1, 1
        %s313 = ssub.s32 %s312, 1
        loop: start=0, step=1, limit=1
        $region182: #{tpu_custom_call.1} parent=180 // loop_pre_header
          _
        $region183: #{tpu_custom_call.1} parent=180 // loop_header
          %s315 = sphi 0, %s319
          %p316 = scmp.ge.s32.totalorder %s315, 1
          %s320 = sphi %s302, %s302
          %s321 = sphi %s303, %s303
        $region184: #{tpu_custom_call.1} parent=180 // loop_header_branch
          %318 = sbr.rel (%p316) target = $region188
        $region185: #{tpu_custom_call.1} parent=180 // loop_body
          %v322 = vld [vmem:[%s320] sm:%s313]
          %323 = vst [vmem:[%s321] sm:%s313] %v322
        $region186: #{tpu_custom_call.1} parent=180 // loop_footer
          %s319 = sadd.s32 1, %s315
        $region187: #{tpu_custom_call.1} parent=180 // loop_footer_branch
          %314 = sbr.rel target = $region183
        $region188: #{tpu_custom_call.1} parent=180 // loop_exit
          _
      $region181: #{tpu_custom_call.1} parent=52 // pred_fallthru
        _
      // Predicated region
      $region200: #{tpu_custom_call.1} parent=52 // pred_check
        _
      $region201: #{tpu_custom_call.1} parent=52 // pred_check_branch
        %348 = sbr.rel (0) target = $region203
      $region202: #{tpu_custom_call.1} parent=52 // pred_region
        %349 = vsyncadd [#allocation2], 16
      $region203: #{tpu_custom_call.1} parent=52 // pred_fallthru
        _
      %s350 = scalar_lea.vmem [#allocation5], %s104
      %s351 = scalar_lea.vmem [#allocation14], 5
      %p353 = scmp.lt.u32.totalorder 1, 8
      %p354 = pneg %p353
      // Predicated region
      $region204: #{tpu_custom_call.1} parent=52 // pred_check
        _
      $region205: #{tpu_custom_call.1} parent=52 // pred_check_branch
        %356 = sbr.rel (%p353) target = $region207
      $region206: #{tpu_custom_call.1} parent=52 // pred_region
        %s372 = sand.u32 1, 7
        %p373 = scmp.eq.s32.totalorder %s372, 0
        %p374 = pneg %p373
        // Predicated region
        $region219: #{tpu_custom_call.1} parent=206 // pred_check
          _
        $region220: #{tpu_custom_call.1} parent=206 // pred_check_branch
          %376 = sbr.rel (%p373) target = $region222
        $region221: #{tpu_custom_call.1} parent=206 // pred_region
          %s377 = sand.u32 1, 7
          %s378 = ssub.s32 1, %s377
          %s379 = scalar_lea.vmem %s350, %s378 [#allocation5]
          %s380 = ssub.s32 1, %s377
          %s381 = scalar_lea.vmem %s351, %s380 [#allocation14]
          %s382 = sshll.u32 1, %s377
          %s383 = ssub.s32 %s382, 1
          loop: start=0, step=1, limit=1
          $region223: #{tpu_custom_call.1} parent=221 // loop_pre_header
            _
          $region224: #{tpu_custom_call.1} parent=221 // loop_header
            %s385 = sphi 0, %s389
            %p386 = scmp.ge.s32.totalorder %s385, 1
            %s390 = sphi %s379, %s379
            %s391 = sphi %s381, %s381
          $region225: #{tpu_custom_call.1} parent=221 // loop_header_branch
            %388 = sbr.rel (%p386) target = $region229
          $region226: #{tpu_custom_call.1} parent=221 // loop_body
            %v392 = vld [vmem:[%s390] sm:%s383]
            %393 = vst [vmem:[%s391] sm:%s383] %v392
          $region227: #{tpu_custom_call.1} parent=221 // loop_footer
            %s389 = sadd.s32 1, %s385
          $region228: #{tpu_custom_call.1} parent=221 // loop_footer_branch
            %384 = sbr.rel target = $region224
          $region229: #{tpu_custom_call.1} parent=221 // loop_exit
            _
        $region222: #{tpu_custom_call.1} parent=206 // pred_fallthru
          _
      $region207: #{tpu_custom_call.1} parent=52 // pred_fallthru
        _
      // Predicated region
      $region208: #{tpu_custom_call.1} parent=52 // pred_check
        %p357 = pneg %p353
      $region209: #{tpu_custom_call.1} parent=52 // pred_check_branch
        %359 = sbr.rel (%p357) target = $region211
      $region210: #{tpu_custom_call.1} parent=52 // pred_region
        %s360 = sshll.u32 1, 1
        %s361 = ssub.s32 %s360, 1
        loop: start=0, step=1, limit=1
        $region212: #{tpu_custom_call.1} parent=210 // loop_pre_header
          _
        $region213: #{tpu_custom_call.1} parent=210 // loop_header
          %s363 = sphi 0, %s367
          %p364 = scmp.ge.s32.totalorder %s363, 1
          %s368 = sphi %s350, %s350
          %s369 = sphi %s351, %s351
        $region214: #{tpu_custom_call.1} parent=210 // loop_header_branch
          %366 = sbr.rel (%p364) target = $region218
        $region215: #{tpu_custom_call.1} parent=210 // loop_body
          %v370 = vld [vmem:[%s368] sm:%s361]
          %371 = vst [vmem:[%s369] sm:%s361] %v370
        $region216: #{tpu_custom_call.1} parent=210 // loop_footer
          %s367 = sadd.s32 1, %s363
        $region217: #{tpu_custom_call.1} parent=210 // loop_footer_branch
          %362 = sbr.rel target = $region213
        $region218: #{tpu_custom_call.1} parent=210 // loop_exit
          _
      $region211: #{tpu_custom_call.1} parent=52 // pred_fallthru
        _
      // Predicated region
      $region230: #{tpu_custom_call.1} parent=52 // pred_check
        _
      $region231: #{tpu_custom_call.1} parent=52 // pred_check_branch
        %396 = sbr.rel (0) target = $region233
      $region232: #{tpu_custom_call.1} parent=52 // pred_region
        %397 = vsyncadd [#allocation2], 16
      $region233: #{tpu_custom_call.1} parent=52 // pred_fallthru
        _
      %s398 = scalar_lea.vmem [#allocation5], %s105
      %s399 = scalar_lea.vmem [#allocation14], 6
      %p401 = scmp.lt.u32.totalorder 1, 8
      %p402 = pneg %p401
      // Predicated region
      $region234: #{tpu_custom_call.1} parent=52 // pred_check
        _
      $region235: #{tpu_custom_call.1} parent=52 // pred_check_branch
        %404 = sbr.rel (%p401) target = $region237
      $region236: #{tpu_custom_call.1} parent=52 // pred_region
        %s420 = sand.u32 1, 7
        %p421 = scmp.eq.s32.totalorder %s420, 0
        %p422 = pneg %p421
        // Predicated region
        $region249: #{tpu_custom_call.1} parent=236 // pred_check
          _
        $region250: #{tpu_custom_call.1} parent=236 // pred_check_branch
          %424 = sbr.rel (%p421) target = $region252
        $region251: #{tpu_custom_call.1} parent=236 // pred_region
          %s425 = sand.u32 1, 7
          %s426 = ssub.s32 1, %s425
          %s427 = scalar_lea.vmem %s398, %s426 [#allocation5]
          %s428 = ssub.s32 1, %s425
          %s429 = scalar_lea.vmem %s399, %s428 [#allocation14]
          %s430 = sshll.u32 1, %s425
          %s431 = ssub.s32 %s430, 1
          loop: start=0, step=1, limit=1
          $region253: #{tpu_custom_call.1} parent=251 // loop_pre_header
            _
          $region254: #{tpu_custom_call.1} parent=251 // loop_header
            %s433 = sphi 0, %s437
            %p434 = scmp.ge.s32.totalorder %s433, 1
            %s438 = sphi %s427, %s427
            %s439 = sphi %s429, %s429
          $region255: #{tpu_custom_call.1} parent=251 // loop_header_branch
            %436 = sbr.rel (%p434) target = $region259
          $region256: #{tpu_custom_call.1} parent=251 // loop_body
            %v440 = vld [vmem:[%s438] sm:%s431]
            %441 = vst [vmem:[%s439] sm:%s431] %v440
          $region257: #{tpu_custom_call.1} parent=251 // loop_footer
            %s437 = sadd.s32 1, %s433
          $region258: #{tpu_custom_call.1} parent=251 // loop_footer_branch
            %432 = sbr.rel target = $region254
          $region259: #{tpu_custom_call.1} parent=251 // loop_exit
            _
        $region252: #{tpu_custom_call.1} parent=236 // pred_fallthru
          _
      $region237: #{tpu_custom_call.1} parent=52 // pred_fallthru
        _
      // Predicated region
      $region238: #{tpu_custom_call.1} parent=52 // pred_check
        %p405 = pneg %p401
      $region239: #{tpu_custom_call.1} parent=52 // pred_check_branch
        %407 = sbr.rel (%p405) target = $region241
      $region240: #{tpu_custom_call.1} parent=52 // pred_region
        %s408 = sshll.u32 1, 1
        %s409 = ssub.s32 %s408, 1
        loop: start=0, step=1, limit=1
        $region242: #{tpu_custom_call.1} parent=240 // loop_pre_header
          _
        $region243: #{tpu_custom_call.1} parent=240 // loop_header
          %s411 = sphi 0, %s415
          %p412 = scmp.ge.s32.totalorder %s411, 1
          %s416 = sphi %s398, %s398
          %s417 = sphi %s399, %s399
        $region244: #{tpu_custom_call.1} parent=240 // loop_header_branch
          %414 = sbr.rel (%p412) target = $region248
        $region245: #{tpu_custom_call.1} parent=240 // loop_body
          %v418 = vld [vmem:[%s416] sm:%s409]
          %419 = vst [vmem:[%s417] sm:%s409] %v418
        $region246: #{tpu_custom_call.1} parent=240 // loop_footer
          %s415 = sadd.s32 1, %s411
        $region247: #{tpu_custom_call.1} parent=240 // loop_footer_branch
          %410 = sbr.rel target = $region243
        $region248: #{tpu_custom_call.1} parent=240 // loop_exit
          _
      $region241: #{tpu_custom_call.1} parent=52 // pred_fallthru
        _
      // Predicated region
      $region260: #{tpu_custom_call.1} parent=52 // pred_check
        _
      $region261: #{tpu_custom_call.1} parent=52 // pred_check_branch
        %444 = sbr.rel (0) target = $region263
      $region262: #{tpu_custom_call.1} parent=52 // pred_region
        %445 = vsyncadd [#allocation2], 16
      $region263: #{tpu_custom_call.1} parent=52 // pred_fallthru
        _
      %s446 = scalar_lea.vmem [#allocation5], %s106
      %s447 = scalar_lea.vmem [#allocation14], 7
      %p449 = scmp.lt.u32.totalorder 1, 8
      %p450 = pneg %p449
      // Predicated region
      $region264: #{tpu_custom_call.1} parent=52 // pred_check
        _
      $region265: #{tpu_custom_call.1} parent=52 // pred_check_branch
        %452 = sbr.rel (%p449) target = $region267
      $region266: #{tpu_custom_call.1} parent=52 // pred_region
        %s468 = sand.u32 1, 7
        %p469 = scmp.eq.s32.totalorder %s468, 0
        %p470 = pneg %p469
        // Predicated region
        $region279: #{tpu_custom_call.1} parent=266 // pred_check
          _
        $region280: #{tpu_custom_call.1} parent=266 // pred_check_branch
          %472 = sbr.rel (%p469) target = $region282
        $region281: #{tpu_custom_call.1} parent=266 // pred_region
          %s473 = sand.u32 1, 7
          %s474 = ssub.s32 1, %s473
          %s475 = scalar_lea.vmem %s446, %s474 [#allocation5]
          %s476 = ssub.s32 1, %s473
          %s477 = scalar_lea.vmem %s447, %s476 [#allocation14]
          %s478 = sshll.u32 1, %s473
          %s479 = ssub.s32 %s478, 1
          loop: start=0, step=1, limit=1
          $region283: #{tpu_custom_call.1} parent=281 // loop_pre_header
            _
          $region284: #{tpu_custom_call.1} parent=281 // loop_header
            %s481 = sphi 0, %s485
            %p482 = scmp.ge.s32.totalorder %s481, 1
            %s486 = sphi %s475, %s475
            %s487 = sphi %s477, %s477
          $region285: #{tpu_custom_call.1} parent=281 // loop_header_branch
            %484 = sbr.rel (%p482) target = $region289
          $region286: #{tpu_custom_call.1} parent=281 // loop_body
            %v488 = vld [vmem:[%s486] sm:%s479]
            %489 = vst [vmem:[%s487] sm:%s479] %v488
          $region287: #{tpu_custom_call.1} parent=281 // loop_footer
            %s485 = sadd.s32 1, %s481
          $region288: #{tpu_custom_call.1} parent=281 // loop_footer_branch
            %480 = sbr.rel target = $region284
          $region289: #{tpu_custom_call.1} parent=281 // loop_exit
            _
        $region282: #{tpu_custom_call.1} parent=266 // pred_fallthru
          _
      $region267: #{tpu_custom_call.1} parent=52 // pred_fallthru
        _
      // Predicated region
      $region268: #{tpu_custom_call.1} parent=52 // pred_check
        %p453 = pneg %p449
      $region269: #{tpu_custom_call.1} parent=52 // pred_check_branch
        %455 = sbr.rel (%p453) target = $region271
      $region270: #{tpu_custom_call.1} parent=52 // pred_region
        %s456 = sshll.u32 1, 1
        %s457 = ssub.s32 %s456, 1
        loop: start=0, step=1, limit=1
        $region272: #{tpu_custom_call.1} parent=270 // loop_pre_header
          _
        $region273: #{tpu_custom_call.1} parent=270 // loop_header
          %s459 = sphi 0, %s463
          %p460 = scmp.ge.s32.totalorder %s459, 1
          %s464 = sphi %s446, %s446
          %s465 = sphi %s447, %s447
        $region274: #{tpu_custom_call.1} parent=270 // loop_header_branch
          %462 = sbr.rel (%p460) target = $region278
        $region275: #{tpu_custom_call.1} parent=270 // loop_body
          %v466 = vld [vmem:[%s464] sm:%s457]
          %467 = vst [vmem:[%s465] sm:%s457] %v466
        $region276: #{tpu_custom_call.1} parent=270 // loop_footer
          %s463 = sadd.s32 1, %s459
        $region277: #{tpu_custom_call.1} parent=270 // loop_footer_branch
          %458 = sbr.rel target = $region273
        $region278: #{tpu_custom_call.1} parent=270 // loop_exit
          _
      $region271: #{tpu_custom_call.1} parent=52 // pred_fallthru
        _
      // Predicated region
      $region290: #{tpu_custom_call.1} parent=52 // pred_check
        _
      $region291: #{tpu_custom_call.1} parent=52 // pred_check_branch
        %492 = sbr.rel (0) target = $region293
      $region292: #{tpu_custom_call.1} parent=52 // pred_region
        %493 = vsyncadd [#allocation2], 16
      $region293: #{tpu_custom_call.1} parent=52 // pred_fallthru
        _
    $region53: #{tpu_custom_call.1} parent=1 // pred_fallthru
      _
    %v494 = vld [vmem:[#allocation8] sm:$0xff]
    %v495 = vld [vmem:[#allocation13] sm:$0xff]
    %v496 = vld [vmem:[#allocation13 + $0x8] sm:$0xff]
    %v497 = vld [vmem:[#allocation13 + $0x10] sm:$0xff]
    %v498 = vld [vmem:[#allocation13 + $0x18] sm:$0xff]
    %v499 = vld [vmem:[#allocation13 + $0x20] sm:$0xff]
    %v500 = vld [vmem:[#allocation13 + $0x28] sm:$0xff]
    %v501 = vld [vmem:[#allocation13 + $0x30] sm:$0xff]
    %v502 = vld [vmem:[#allocation13 + $0x38] sm:$0xff]
    %v503 = vld [vmem:[#allocation13 + $0x40] sm:$0xff]
    %v504 = vld [vmem:[#allocation13 + $0x48] sm:$0xff]
    %v505 = vld [vmem:[#allocation13 + $0x50] sm:$0xff]
    %v506 = vld [vmem:[#allocation13 + $0x58] sm:$0xff]
    %v507 = vld [vmem:[#allocation13 + $0x60] sm:$0xff]
    %v508 = vld [vmem:[#allocation13 + $0x68] sm:$0xff]
    %v509 = vld [vmem:[#allocation13 + $0x70] sm:$0xff]
    %v510 = vld [vmem:[#allocation13 + $0x78] sm:$0xff]
    %v511 = vld [vmem:[#allocation13 + $0x80] sm:$0xff]
    %v512 = vld [vmem:[#allocation13 + $0x88] sm:$0xff]
    %v513 = vld [vmem:[#allocation13 + $0x90] sm:$0xff]
    %v514 = vld [vmem:[#allocation13 + $0x98] sm:$0xff]
    %v515 = vld [vmem:[#allocation13 + $0xa0] sm:$0xff]
    %v516 = vld [vmem:[#allocation13 + $0xa8] sm:$0xff]
    %v517 = vld [vmem:[#allocation13 + $0xb0] sm:$0xff]
    %v518 = vld [vmem:[#allocation13 + $0xb8] sm:$0xff]
    %v519 = vld [vmem:[#allocation13 + $0xc0] sm:$0xff]
    %v520 = vld [vmem:[#allocation13 + $0xc8] sm:$0xff]
    %v521 = vld [vmem:[#allocation13 + $0xd0] sm:$0xff]
    %v522 = vld [vmem:[#allocation13 + $0xd8] sm:$0xff]
    %v523 = vld [vmem:[#allocation13 + $0xe0] sm:$0xff]
    %v524 = vld [vmem:[#allocation13 + $0xe8] sm:$0xff]
    %v525 = vld [vmem:[#allocation13 + $0xf0] sm:$0xff]
    %v526 = vld [vmem:[#allocation13 + $0xf8] sm:$0xff]
    %v527 = vld [vmem:[#allocation13 + $0x100] sm:$0xff]
    %v528 = vld [vmem:[#allocation13 + $0x108] sm:$0xff]
    %v529 = vld [vmem:[#allocation13 + $0x110] sm:$0xff]
    %v530 = vld [vmem:[#allocation13 + $0x118] sm:$0xff]
    %v531 = vld [vmem:[#allocation13 + $0x120] sm:$0xff]
    %v532 = vld [vmem:[#allocation13 + $0x128] sm:$0xff]
    %v533 = vld [vmem:[#allocation13 + $0x130] sm:$0xff]
    %v534 = vld [vmem:[#allocation13 + $0x138] sm:$0xff]
    %v535 = vld [vmem:[#allocation13 + $0x140] sm:$0xff]
    %v536 = vld [vmem:[#allocation13 + $0x148] sm:$0xff]
    %v537 = vld [vmem:[#allocation13 + $0x150] sm:$0xff]
    %v538 = vld [vmem:[#allocation13 + $0x158] sm:$0xff]
    %v539 = vld [vmem:[#allocation13 + $0x160] sm:$0xff]
    %v540 = vld [vmem:[#allocation13 + $0x168] sm:$0xff]
    %v541 = vld [vmem:[#allocation13 + $0x170] sm:$0xff]
    %v542 = vld [vmem:[#allocation13 + $0x178] sm:$0xff]
    %543 = vmatprep.subr.mxu0 %v541
    %544 = vmatpush1.msra.mxu0 %v540
    %545 = vmatprep.subr.mxu0 %v538
    %546 = vmatpush1.msra.mxu0 %v537
    %547 = vmatprep.subr.mxu0 %v535
    %548 = vmatpush1.msra.mxu0 %v534
    %549 = vmatprep.subr.mxu0 %v532
    %550 = vmatpush1.msra.mxu0 %v531
    %551 = vmatprep.subr.mxu0 %v529
    %552 = vmatpush1.msra.mxu0 %v528
    %553 = vmatprep.subr.mxu0 %v526
    %554 = vmatpush1.msra.mxu0 %v525
    %555 = vmatprep.subr.mxu0 %v523
    %556 = vmatpush1.msra.mxu0 %v522
    %557 = vmatprep.subr.mxu0 %v520
    %558 = vmatpush1.msra.mxu0 %v519
    %559 = vmatprep.subr.mxu0 %v517
    %560 = vmatpush1.msra.mxu0 %v516
    %561 = vmatprep.subr.mxu0 %v514
    %562 = vmatpush1.msra.mxu0 %v513
    %563 = vmatprep.subr.mxu0 %v511
    %564 = vmatpush1.msra.mxu0 %v510
    %565 = vmatprep.subr.mxu0 %v508
    %566 = vmatpush1.msra.mxu0 %v507
    %567 = vmatprep.subr.mxu0 %v505
    %568 = vmatpush1.msra.mxu0 %v504
    %569 = vmatprep.subr.mxu0 %v502
    %570 = vmatpush1.msra.mxu0 %v501
    %571 = vmatprep.subr.mxu0 %v499
    %572 = vmatpush1.msra.mxu0 %v498
    %573 = vmatprep.subr.mxu0 %v496
    %574 = vmatpush1.msra.mxu0 %v495
    %575 = vmatprep.subr.mxu0 0.0
    %576 = vmatpush2.msra.mxu0 0.0
    %577 = vmatprep.subr.mxu0 0.0
    %578 = vmatpush2.msra.mxu0 0.0
    %579 = vmatprep.subr.mxu0 0.0
    %580 = vmatpush2.msra.mxu0 0.0
    %581 = vmatprep.subr.mxu0 0.0
    %582 = vmatpush2.msra.mxu0 0.0
    %583 = vmatprep.subr.mxu0 0.0
    %584 = vmatpush2.msra.mxu0 0.0
    %585 = vmatprep.subr.mxu0 0.0
    %586 = vmatpush2.msra.mxu0 0.0
    %587 = vmatprep.subr.mxu0 0.0
    %588 = vmatpush2.msra.mxu0 0.0
    %589 = vmatprep.subr.mxu0 0.0
    %590 = vmatpush2.msra.mxu0 0.0
    %591 = vmatprep.subr.mxu0 0.0
    %592 = vmatpush2.msra.mxu0 0.0
    %593 = vmatprep.subr.mxu0 0.0
    %594 = vmatpush2.msra.mxu0 0.0
    %595 = vmatprep.subr.mxu0 0.0
    %596 = vmatpush2.msra.mxu0 0.0
    %597 = vmatprep.subr.mxu0 0.0
    %598 = vmatpush2.msra.mxu0 0.0
    %599 = vmatprep.subr.mxu0 0.0
    %600 = vmatpush2.msra.mxu0 0.0
    %601 = vmatprep.subr.mxu0 0.0
    %602 = vmatpush2.msra.mxu0 0.0
    %603 = vmatprep.subr.mxu0 0.0
    %604 = vmatpush2.msra.mxu0 0.0
    %605 = vmatprep.subr.mxu0 0.0
    %606 = vmatpush2.msra.mxu0 0.0
    %607 = vmatprep.mubr.f32.mxu0 0.0
    %608 = vmatmul.mubr.f32.gmra.mxu0 %v494
    %v609 = vpop.f32.mrf.mxu0
    %v610 = vadd.f32 0.0, %v609
    %v611 = vpop.f32.mrf.mxu0
    %v612 = vadd.f32 0.0, %v611
    %613 = vdwg.mxu0
    %614 = vmatprep.subr.mxu0 0.0
    %615 = vmatpush1.msra.mxu0 %v542
    %616 = vmatprep.subr.mxu0 0.0
    %617 = vmatpush1.msra.mxu0 %v539
    %618 = vmatprep.subr.mxu0 0.0
    %619 = vmatpush1.msra.mxu0 %v536
    %620 = vmatprep.subr.mxu0 0.0
    %621 = vmatpush1.msra.mxu0 %v533
    %622 = vmatprep.subr.mxu0 0.0
    %623 = vmatpush1.msra.mxu0 %v530
    %624 = vmatprep.subr.mxu0 0.0
    %625 = vmatpush1.msra.mxu0 %v527
    %626 = vmatprep.subr.mxu0 0.0
    %627 = vmatpush1.msra.mxu0 %v524
    %628 = vmatprep.subr.mxu0 0.0
    %629 = vmatpush1.msra.mxu0 %v521
    %630 = vmatprep.subr.mxu0 0.0
    %631 = vmatpush1.msra.mxu0 %v518
    %632 = vmatprep.subr.mxu0 0.0
    %633 = vmatpush1.msra.mxu0 %v515
    %634 = vmatprep.subr.mxu0 0.0
    %635 = vmatpush1.msra.mxu0 %v512
    %636 = vmatprep.subr.mxu0 0.0
    %637 = vmatpush1.msra.mxu0 %v509
    %638 = vmatprep.subr.mxu0 0.0
    %639 = vmatpush1.msra.mxu0 %v506
    %640 = vmatprep.subr.mxu0 0.0
    %641 = vmatpush1.msra.mxu0 %v503
    %642 = vmatprep.subr.mxu0 0.0
    %643 = vmatpush1.msra.mxu0 %v500
    %644 = vmatprep.subr.mxu0 0.0
    %645 = vmatpush1.msra.mxu0 %v497
    %646 = vmatprep.subr.mxu0 0.0
    %647 = vmatpush2.msra.mxu0 0.0
    %648 = vmatprep.subr.mxu0 0.0
    %649 = vmatpush2.msra.mxu0 0.0
    %650 = vmatprep.subr.mxu0 0.0
    %651 = vmatpush2.msra.mxu0 0.0
    %652 = vmatprep.subr.mxu0 0.0
    %653 = vmatpush2.msra.mxu0 0.0
    %654 = vmatprep.subr.mxu0 0.0
    %655 = vmatpush2.msra.mxu0 0.0
    %656 = vmatprep.subr.mxu0 0.0
    %657 = vmatpush2.msra.mxu0 0.0
    %658 = vmatprep.subr.mxu0 0.0
    %659 = vmatpush2.msra.mxu0 0.0
    %660 = vmatprep.subr.mxu0 0.0
    %661 = vmatpush2.msra.mxu0 0.0
    %662 = vmatprep.subr.mxu0 0.0
    %663 = vmatpush2.msra.mxu0 0.0
    %664 = vmatprep.subr.mxu0 0.0
    %665 = vmatpush2.msra.mxu0 0.0
    %666 = vmatprep.subr.mxu0 0.0
    %667 = vmatpush2.msra.mxu0 0.0
    %668 = vmatprep.subr.mxu0 0.0
    %669 = vmatpush2.msra.mxu0 0.0
    %670 = vmatprep.subr.mxu0 0.0
    %671 = vmatpush2.msra.mxu0 0.0
    %672 = vmatprep.subr.mxu0 0.0
    %673 = vmatpush2.msra.mxu0 0.0
    %674 = vmatprep.subr.mxu0 0.0
    %675 = vmatpush2.msra.mxu0 0.0
    %676 = vmatprep.subr.mxu0 0.0
    %677 = vmatpush2.msra.mxu0 0.0
    %678 = vmatprep.mubr.f32.mxu0 0.0
    %679 = vmatmul.mubr.f32.gmra.mxu0 %v494
    %v680 = vpop.f32.mrf.mxu0
    %v681 = vadd.f32 0.0, %v680
    %v682 = vpop.f32.mrf.mxu0
    %683 = vdwg.mxu0
    // Predicated region
    $region294: #{tpu_custom_call.1} parent=1 // pred_check
      %p684 = pneg %p107
    $region295: #{tpu_custom_call.1} parent=1 // pred_check_branch
      %686 = sbr.rel (%p684) target = $region297
    $region296: #{tpu_custom_call.1} parent=1 // pred_region
      %s687 = smul.u32 1, 1
      %s688 = sshll.u32 %s687, 4
      %689 = dma.done [#allocation2], %s688
      %s690 = sshll.u32 %s687, 4
      %691 = dma.done [#allocation2], %s690
      %s692 = sshll.u32 %s687, 4
      %693 = dma.done [#allocation2], %s692
      %s694 = sshll.u32 %s687, 4
      %695 = dma.done [#allocation2], %s694
      %s696 = sshll.u32 %s687, 4
      %697 = dma.done [#allocation2], %s696
      %s698 = sshll.u32 %s687, 4
      %699 = dma.done [#allocation2], %s698
      %s700 = sshll.u32 %s687, 4
      %701 = dma.done [#allocation2], %s700
      %s702 = sshll.u32 %s687, 4
      %703 = dma.done [#allocation2], %s702
    $region297: #{tpu_custom_call.1} parent=1 // pred_fallthru
      _
    %v704 = vld [vmem:[#allocation14] sm:$0xff]
    %v705 = vld [vmem:[#allocation11] sm:$0xff]
    %v706 = vld [vmem:[#allocation11 + $0x8] sm:$0xff]
    %v707 = vld [vmem:[#allocation11 + $0x10] sm:$0xff]
    %v708 = vld [vmem:[#allocation11 + $0x18] sm:$0xff]
    %v709 = vld [vmem:[#allocation11 + $0x20] sm:$0xff]
    %v710 = vld [vmem:[#allocation11 + $0x28] sm:$0xff]
    %v711 = vld [vmem:[#allocation11 + $0x30] sm:$0xff]
    %v712 = vld [vmem:[#allocation11 + $0x38] sm:$0xff]
    %v713 = vld [vmem:[#allocation11 + $0x40] sm:$0xff]
    %v714 = vld [vmem:[#allocation11 + $0x48] sm:$0xff]
    %v715 = vld [vmem:[#allocation11 + $0x50] sm:$0xff]
    %v716 = vld [vmem:[#allocation11 + $0x58] sm:$0xff]
    %v717 = vld [vmem:[#allocation11 + $0x60] sm:$0xff]
    %v718 = vld [vmem:[#allocation11 + $0x68] sm:$0xff]
    %v719 = vld [vmem:[#allocation11 + $0x70] sm:$0xff]
    %v720 = vld [vmem:[#allocation11 + $0x78] sm:$0xff]
    %v721 = vld [vmem:[#allocation11 + $0x80] sm:$0xff]
    %v722 = vld [vmem:[#allocation11 + $0x88] sm:$0xff]
    %v723 = vld [vmem:[#allocation11 + $0x90] sm:$0xff]
    %v724 = vld [vmem:[#allocation11 + $0x98] sm:$0xff]
    %v725 = vld [vmem:[#allocation11 + $0xa0] sm:$0xff]
    %v726 = vld [vmem:[#allocation11 + $0xa8] sm:$0xff]
    %v727 = vld [vmem:[#allocation11 + $0xb0] sm:$0xff]
    %v728 = vld [vmem:[#allocation11 + $0xb8] sm:$0xff]
    %v729 = vld [vmem:[#allocation11 + $0xc0] sm:$0xff]
    %v730 = vld [vmem:[#allocation11 + $0xc8] sm:$0xff]
    %v731 = vld [vmem:[#allocation11 + $0xd0] sm:$0xff]
    %v732 = vld [vmem:[#allocation11 + $0xd8] sm:$0xff]
    %v733 = vld [vmem:[#allocation11 + $0xe0] sm:$0xff]
    %v734 = vld [vmem:[#allocation11 + $0xe8] sm:$0xff]
    %v735 = vld [vmem:[#allocation11 + $0xf0] sm:$0xff]
    %v736 = vld [vmem:[#allocation11 + $0xf8] sm:$0xff]
    %v737 = vld [vmem:[#allocation11 + $0x100] sm:$0xff]
    %v738 = vld [vmem:[#allocation11 + $0x108] sm:$0xff]
    %v739 = vld [vmem:[#allocation11 + $0x110] sm:$0xff]
    %v740 = vld [vmem:[#allocation11 + $0x118] sm:$0xff]
    %v741 = vld [vmem:[#allocation11 + $0x120] sm:$0xff]
    %v742 = vld [vmem:[#allocation11 + $0x128] sm:$0xff]
    %v743 = vld [vmem:[#allocation11 + $0x130] sm:$0xff]
    %v744 = vld [vmem:[#allocation11 + $0x138] sm:$0xff]
    %v745 = vld [vmem:[#allocation11 + $0x140] sm:$0xff]
    %v746 = vld [vmem:[#allocation11 + $0x148] sm:$0xff]
    %v747 = vld [vmem:[#allocation11 + $0x150] sm:$0xff]
    %v748 = vld [vmem:[#allocation11 + $0x158] sm:$0xff]
    %v749 = vld [vmem:[#allocation11 + $0x160] sm:$0xff]
    %v750 = vld [vmem:[#allocation11 + $0x168] sm:$0xff]
    %v751 = vld [vmem:[#allocation11 + $0x170] sm:$0xff]
    %v752 = vld [vmem:[#allocation11 + $0x178] sm:$0xff]
    %v753 = vld [vmem:[%s6] sm:$0x7]
    %v755 = vlaneseq
    %v756 = vshrl.u32 %v755, 7
    %v757 = vsub.s32 0, %v756
    %v758 = vrot.slane %v753, %v757
    %v759 = vlaneseq
    %v760 = vshrl.u32 %v759, 7
    %v761 = vsub.s32 1, %v760
    %v762 = vrot.slane %v753, %v761
    %v763 = vlaneseq
    %v764 = vshrl.u32 %v763, 7
    %v765 = vsub.s32 2, %v764
    %v766 = vrot.slane %v753, %v765
    %770 = vmatprep.subr.mxu0 %v751
    %771 = vmatpush1.msra.mxu0 %v750
    %772 = vmatprep.subr.mxu0 %v748
    %773 = vmatpush1.msra.mxu0 %v747
    %774 = vmatprep.subr.mxu0 %v745
    %775 = vmatpush1.msra.mxu0 %v744
    %776 = vmatprep.subr.mxu0 %v742
    %777 = vmatpush1.msra.mxu0 %v741
    %778 = vmatprep.subr.mxu0 %v739
    %779 = vmatpush1.msra.mxu0 %v738
    %780 = vmatprep.subr.mxu0 %v736
    %781 = vmatpush1.msra.mxu0 %v735
    %782 = vmatprep.subr.mxu0 %v733
    %783 = vmatpush1.msra.mxu0 %v732
    %784 = vmatprep.subr.mxu0 %v730
    %785 = vmatpush1.msra.mxu0 %v729
    %786 = vmatprep.subr.mxu0 %v727
    %787 = vmatpush1.msra.mxu0 %v726
    %788 = vmatprep.subr.mxu0 %v724
    %789 = vmatpush1.msra.mxu0 %v723
    %790 = vmatprep.subr.mxu0 %v721
    %791 = vmatpush1.msra.mxu0 %v720
    %792 = vmatprep.subr.mxu0 %v718
    %793 = vmatpush1.msra.mxu0 %v717
    %794 = vmatprep.subr.mxu0 %v715
    %795 = vmatpush1.msra.mxu0 %v714
    %796 = vmatprep.subr.mxu0 %v712
    %797 = vmatpush1.msra.mxu0 %v711
    %798 = vmatprep.subr.mxu0 %v709
    %799 = vmatpush1.msra.mxu0 %v708
    %800 = vmatprep.subr.mxu0 %v706
    %801 = vmatpush1.msra.mxu0 %v705
    %802 = vmatprep.subr.mxu0 0.0
    %803 = vmatpush2.msra.mxu0 0.0
    %804 = vmatprep.subr.mxu0 0.0
    %805 = vmatpush2.msra.mxu0 0.0
    %806 = vmatprep.subr.mxu0 0.0
    %807 = vmatpush2.msra.mxu0 0.0
    %808 = vmatprep.subr.mxu0 0.0
    %809 = vmatpush2.msra.mxu0 0.0
    %810 = vmatprep.subr.mxu0 0.0
    %811 = vmatpush2.msra.mxu0 0.0
    %812 = vmatprep.subr.mxu0 0.0
    %813 = vmatpush2.msra.mxu0 0.0
    %814 = vmatprep.subr.mxu0 0.0
    %815 = vmatpush2.msra.mxu0 0.0
    %816 = vmatprep.subr.mxu0 0.0
    %817 = vmatpush2.msra.mxu0 0.0
    %818 = vmatprep.subr.mxu0 0.0
    %819 = vmatpush2.msra.mxu0 0.0
    %820 = vmatprep.subr.mxu0 0.0
    %821 = vmatpush2.msra.mxu0 0.0
    %822 = vmatprep.subr.mxu0 0.0
    %823 = vmatpush2.msra.mxu0 0.0
    %824 = vmatprep.subr.mxu0 0.0
    %825 = vmatpush2.msra.mxu0 0.0
    %826 = vmatprep.subr.mxu0 0.0
    %827 = vmatpush2.msra.mxu0 0.0
    %828 = vmatprep.subr.mxu0 0.0
    %829 = vmatpush2.msra.mxu0 0.0
    %830 = vmatprep.subr.mxu0 0.0
    %831 = vmatpush2.msra.mxu0 0.0
    %832 = vmatprep.subr.mxu0 0.0
    %833 = vmatpush2.msra.mxu0 0.0
    %834 = vmatprep.mubr.f32.mxu0 0.0
    %835 = vmatmul.mubr.f32.gmra.mxu0 %v704
    %v836 = vpop.f32.mrf.mxu0
    %v837 = vadd.f32 %v758, %v836
    %v838 = vpop.f32.mrf.mxu0
    %v839 = vadd.f32 %v762, %v838
    %840 = vdwg.mxu0
    %841 = vmatprep.subr.mxu0 0.0
    %842 = vmatpush1.msra.mxu0 %v752
    %843 = vmatprep.subr.mxu0 0.0
    %844 = vmatpush1.msra.mxu0 %v749
    %845 = vmatprep.subr.mxu0 0.0
    %846 = vmatpush1.msra.mxu0 %v746
    %847 = vmatprep.subr.mxu0 0.0
    %848 = vmatpush1.msra.mxu0 %v743
    %849 = vmatprep.subr.mxu0 0.0
    %850 = vmatpush1.msra.mxu0 %v740
    %851 = vmatprep.subr.mxu0 0.0
    %852 = vmatpush1.msra.mxu0 %v737
    %853 = vmatprep.subr.mxu0 0.0
    %854 = vmatpush1.msra.mxu0 %v734
    %855 = vmatprep.subr.mxu0 0.0
    %856 = vmatpush1.msra.mxu0 %v731
    %857 = vmatprep.subr.mxu0 0.0
    %858 = vmatpush1.msra.mxu0 %v728
    %859 = vmatprep.subr.mxu0 0.0
    %860 = vmatpush1.msra.mxu0 %v725
    %861 = vmatprep.subr.mxu0 0.0
    %862 = vmatpush1.msra.mxu0 %v722
    %863 = vmatprep.subr.mxu0 0.0
    %864 = vmatpush1.msra.mxu0 %v719
    %865 = vmatprep.subr.mxu0 0.0
    %866 = vmatpush1.msra.mxu0 %v716
    %867 = vmatprep.subr.mxu0 0.0
    %868 = vmatpush1.msra.mxu0 %v713
    %869 = vmatprep.subr.mxu0 0.0
    %870 = vmatpush1.msra.mxu0 %v710
    %871 = vmatprep.subr.mxu0 0.0
    %872 = vmatpush1.msra.mxu0 %v707
    %873 = vmatprep.subr.mxu0 0.0
    %874 = vmatpush2.msra.mxu0 0.0
    %875 = vmatprep.subr.mxu0 0.0
    %876 = vmatpush2.msra.mxu0 0.0
    %877 = vmatprep.subr.mxu0 0.0
    %878 = vmatpush2.msra.mxu0 0.0
    %879 = vmatprep.subr.mxu0 0.0
    %880 = vmatpush2.msra.mxu0 0.0
    %881 = vmatprep.subr.mxu0 0.0
    %882 = vmatpush2.msra.mxu0 0.0
    %883 = vmatprep.subr.mxu0 0.0
    %884 = vmatpush2.msra.mxu0 0.0
    %885 = vmatprep.subr.mxu0 0.0
    %886 = vmatpush2.msra.mxu0 0.0
    %887 = vmatprep.subr.mxu0 0.0
    %888 = vmatpush2.msra.mxu0 0.0
    %889 = vmatprep.subr.mxu0 0.0
    %890 = vmatpush2.msra.mxu0 0.0
    %891 = vmatprep.subr.mxu0 0.0
    %892 = vmatpush2.msra.mxu0 0.0
    %893 = vmatprep.subr.mxu0 0.0
    %894 = vmatpush2.msra.mxu0 0.0
    %895 = vmatprep.subr.mxu0 0.0
    %896 = vmatpush2.msra.mxu0 0.0
    %897 = vmatprep.subr.mxu0 0.0
    %898 = vmatpush2.msra.mxu0 0.0
    %899 = vmatprep.subr.mxu0 0.0
    %900 = vmatpush2.msra.mxu0 0.0
    %901 = vmatprep.subr.mxu0 0.0
    %902 = vmatpush2.msra.mxu0 0.0
    %903 = vmatprep.subr.mxu0 0.0
    %904 = vmatpush2.msra.mxu0 0.0
    %905 = vmatprep.mubr.f32.mxu0 0.0
    %906 = vmatmul.mubr.f32.gmra.mxu0 %v704
    %v907 = vpop.f32.mrf.mxu0
    %v908 = vadd.f32 %v766, %v907
    %v909 = vpop.f32.mrf.mxu0
    %910 = vdwg.mxu0
    %v911 = vadd.f32 %v837, %v610
    %v912 = vxor.u32 %v911, 2147483648
    %v913 = vmul.f32 %v912, 1.442695
    %v914 = vpow.pop %v913
    %v915 = vadd.f32 %v914, 1.0
    %v916 = vrcp.pop %v915
    %v917 = vmul.f32 1.0, %v916
    %v918 = vadd.f32 %v839, %v612
    %v919 = vxor.u32 %v918, 2147483648
    %v920 = vmul.f32 %v919, 1.442695
    %v921 = vpow.pop %v920
    %v922 = vadd.f32 %v921, 1.0
    %v923 = vrcp.pop %v922
    %v924 = vmul.f32 1.0, %v923
    %v925 = vld [vmem:[%s7] sm:$0x1]
    %v927 = vlaneseq
    %v928 = vshrl.u32 %v927, 7
    %v929 = vsub.s32 0, %v928
    %v930 = vrot.slane %v925, %v929
    %v932 = vadd.f32 %v681, %v930
    %v933 = vmul.f32 %v917, %v932
    %v934 = vadd.f32 %v908, %v933
    %v935 = vtanh.pop %v934
    %v936 = vsub.f32 1.0, %v924
    %v937 = vmul.f32 %v936, %v935
    %v938 = vld [vmem:[#allocation10] sm:$0xff]
    %v939 = vmul.f32 %v924, %v938
    %v940 = vadd.f32 %v937, %v939
    %941 = vst [vmem:[#allocation15] sm:$0xff] %v940
    // Predicated region
    $region298: #{tpu_custom_call.1} parent=1 // pred_check
      _
    $region299: #{tpu_custom_call.1} parent=1 // pred_check_branch
      %943 = sbr.rel (0) target = $region301
    $region300: #{tpu_custom_call.1} parent=1 // pred_region
      %s945 = ssub.s32 128, 128
      %946 = vsyncadd [#allocation7], %s945
      %s948 = sshll.u32 [#allocation14], 4
      %s949 = int_to_ptr.vmem [resolvable:$true] %s948
      %951 = dma.vmem_to_hbm [thread:$0]  %s949, 128, %s8, [#allocation7]
    $region301: #{tpu_custom_call.1} parent=1 // pred_fallthru
      _
    // Predicated region
    $region302: #{tpu_custom_call.1} parent=1 // pred_check
      _
    $region303: #{tpu_custom_call.1} parent=1 // pred_check_branch
      %953 = sbr.rel (0) target = $region305
    $region304: #{tpu_custom_call.1} parent=1 // pred_region
      %s955 = ssub.s32 128, 128
      %956 = vsyncadd [#allocation16], %s955
      %s958 = sshll.u32 [#allocation15], 4
      %s959 = int_to_ptr.vmem [resolvable:$true] %s958
      %961 = dma.vmem_to_hbm [thread:$0]  %s959, 128, %s9, [#allocation16]
    $region305: #{tpu_custom_call.1} parent=1 // pred_fallthru
      _
    // Predicated region
    $region306: #{tpu_custom_call.1} parent=1 // pred_check
      _
    $region307: #{tpu_custom_call.1} parent=1 // pred_check_branch
      %963 = sbr.rel (0) target = $region309
    $region308: #{tpu_custom_call.1} parent=1 // pred_region
      %964 = dma.done [#allocation7], 128
    $region309: #{tpu_custom_call.1} parent=1 // pred_fallthru
      _
    // Predicated region
    $region310: #{tpu_custom_call.1} parent=1 // pred_check
      _
    $region311: #{tpu_custom_call.1} parent=1 // pred_check_branch
      %966 = sbr.rel (0) target = $region313
    $region312: #{tpu_custom_call.1} parent=1 // pred_region
      %967 = dma.done [#allocation16], 128
    $region313: #{tpu_custom_call.1} parent=1 // pred_fallthru
      _
    %968 = vsyncpa [#allocation6], 1
    %969 = vsyncpa [#allocation9], 1
    %970 = vsyncpa [#allocation12], 1
    %971 = vsyncpa [#allocation7], 1
    %972 = vsyncpa [#allocation16], 1
  %973 = vsyncmov [#allocation2]
  %s974 = vpop.sfrf %973
  %p975 = scmp.eq.s32.totalorder %s974, 0
  %p976 = pneg %p975
  %978 = shalt.err (%p976)

</llo_original>
